<compile_context>
chip_gen: v6e
topology: v6e:2x2x1
jax: 0.10.0
libtpu: 0.0.40
codegen_flags: <defaults>
</compile_context>

<pallas_src>
import functools

import jax
import jax.numpy as jnp
from jax.experimental import pallas as pl
from jax.experimental.pallas import tpu as pltpu

BN_EPS = 1e-5


# -----------------------------------------------------------------------------
# Fused Pallas kernel
# -----------------------------------------------------------------------------
def _down_block(h, w, b, slope):
    """One ConvNormRelu down block (BN + residual already folded into w, b).

    h: (li, C) f32 activation (VMEM/vreg resident value)
    w: (4*C, C) folded weights (k-major rows), b: (1, C) folded bias (f32)
    Conv1d(k=4, s=2, pad=1): output row t reads input rows 2t-1 .. 2t+2.
    The unfold is done with four constant 0/1 selection matrices on the MXU, so no
    strided slices / reshapes are needed; out-of-range rows select nothing => zero pad.
    """
    li, c = h.shape
    lo = li // 2
    t_idx = jax.lax.broadcasted_iota(jnp.int32, (lo, li), 0)   # output position
    s_idx = jax.lax.broadcasted_iota(jnp.int32, (lo, li), 1)   # input row
    taps = []
    for k in range(4):
        sel = (s_idx == 2 * t_idx + (k - 1)).astype(h.dtype)   # (lo, li) 0/1, constant
        taps.append(jnp.dot(sel, h, preferred_element_type=jnp.float32))
    cols = jnp.concatenate(taps, axis=-1)                      # (lo, 4C), k-major
    y = jnp.dot(cols.astype(w.dtype), w, preferred_element_type=jnp.float32) + b
    return jnp.where(y > 0, y, slope * y)                      # LeakyReLU(0.2)


def _fused_encoder_kernel(x_ref, wf_ref, ws_ref, bs_ref, o_ref, *,
                          slope_fm, slope_down):
    # x_ref : (1, L, Cin)      input block for this batch element
    # wf_ref: (Cin, C)         folded 1x1-conv (feature_map) weights
    # ws_ref: (3, 4*C, C)      folded down-block weights (stacked)
    # bs_ref: (4, C)  f32      folded biases: row 0 = feature_map, rows 1..3 = blocks
    # o_ref : (1, L//8, C)
    biases = bs_ref[...]                                        # (4, C) f32, one load

    # feature_map: 1x1 conv (+folded BN) + LeakyReLU(0.1); epilogue kept in f32 (v5e).
    x = x_ref[0].astype(wf_ref.dtype)                           # (L, Cin)
    h = jnp.dot(x, wf_ref[...], preferred_element_type=jnp.float32)
    h = h + biases[0:1, :].astype(jnp.float32)
    h = jnp.where(h > 0, h, slope_fm * h)                       # (L, C) f32

    # Three down blocks, activation stays in vregs/VMEM (no HBM round trips).
    for blk in range(3):
        w = ws_ref[blk]                                         # (4C, C)
        b = biases[blk + 1:blk + 2, :].astype(jnp.float32)      # (1, C)
        h = _down_block(h, w, b, slope_down)

    o_ref[0] = h.astype(o_ref.dtype)                            # (L//8, C)


# -----------------------------------------------------------------------------
# Host-side parameter folding (one-time)
# -----------------------------------------------------------------------------
def _fold_bn(gamma, beta, mean, var):
    scale = gamma / jnp.sqrt(var + BN_EPS)
    shift = beta - mean * scale
    return scale, shift


def _conv_w_to_matmul(w_oik):
    """Conv1d weight (C_out, C_in, K) -> (K*C_in, C_out), k-major rows."""
    C_out, C_in, K = w_oik.shape
    return jnp.transpose(w_oik, (2, 1, 0)).reshape(K * C_in, C_out)


def fold_params(params, compute_dtype=jnp.float32):
    """Fold eval-mode BN + residual conv into the main conv weights/biases.

    compute_dtype: matmul operand dtype (use jnp.bfloat16 on v6e/v7x for larger
    models; biases / epilogue stay f32).
    """
    # feature_map: scale*(x@W + b) + shift  ==  x@(W*scale) + (b*scale + shift)
    wf = jnp.transpose(params["fm_w"][:, :, 0], (1, 0)) * params["fm_scale"][None, :]
    bf = params["fm_b"] * params["fm_scale"] + params["fm_shift"]

    ws, bs = [], [bf]
    for i in (1, 2, 3):
        wm = _conv_w_to_matmul(params[f"d{i}_wm"])
        wr = _conv_w_to_matmul(params[f"d{i}_wr"])
        scale, shift = params[f"d{i}_scale"], params[f"d{i}_shift"]
        # scale*(x@Wm + bm) + shift + x@Wr + br == x@(scale*Wm + Wr) + (scale*bm+shift+br)
        ws.append(wm * scale[None, :] + wr)
        bs.append(params[f"d{i}_bm"] * scale + shift + params[f"d{i}_br"])

    return {
        "wf": wf.astype(compute_dtype),             # (Cin, C)
        "ws": jnp.stack(ws).astype(compute_dtype),  # (3, 4C, C)
        "bs": jnp.stack(bs).astype(jnp.float32),    # (4, C)
    }


# -----------------------------------------------------------------------------
# Forward (single pallas_call). PyTorch layout in/out: (B, C, L).
# -----------------------------------------------------------------------------
def condition_encoder_apply(ops, x_ncl):
    wf, ws, bs = ops["wf"], ops["ws"], ops["bs"]
    B, Cin, L = x_ncl.shape
    C = wf.shape[1]
    assert L % 8 == 0, "three stride-2 down blocks require L % 8 == 0"
    Lout = L // 8

    x_blc = jnp.transpose(x_ncl, (0, 2, 1))                     # NCL -> NLC

    # Cost estimate (advisory).
    flops = 2 * B * L * Cin * C
    li = L
    for _ in range(3):
        lo = li // 2
        flops += B * (4 * 2 * lo * li * C + 2 * lo * (4 * C) * C)
        li = lo
    bytes_accessed = (x_blc.size * x_blc.dtype.itemsize
                      + wf.size * wf.dtype.itemsize
                      + ws.size * ws.dtype.itemsize
                      + bs.size * bs.dtype.itemsize
                      + B * Lout * C * 4)

    kernel = functools.partial(_fused_encoder_kernel, slope_fm=0.1, slope_down=0.2)
    out_blc = pl.pallas_call(
        kernel,
        out_shape=jax.ShapeDtypeStruct((B, Lout, C), jnp.float32),
        grid=(B,),
        in_specs=[
            pl.BlockSpec((1, L, Cin), lambda i: (i, 0, 0)),
            pl.BlockSpec((Cin, C), lambda i: (0, 0)),
            pl.BlockSpec((3, 4 * C, C), lambda i: (0, 0, 0)),
            pl.BlockSpec((4, C), lambda i: (0, 0)),
        ],
        out_specs=pl.BlockSpec((1, Lout, C), lambda i: (i, 0, 0)),
        compiler_params=pltpu.CompilerParams(
            dimension_semantics=("parallel",)),     # v7x: one batch element per TC
        cost_estimate=pl.CostEstimate(
            flops=int(flops), transcendentals=0, bytes_accessed=int(bytes_accessed)),
    )(x_blc, wf, ws, bs)

    return jnp.transpose(out_blc, (0, 2, 1))                    # NLC -> NCL


def condition_encoder_forward(params, x_ncl, compute_dtype=jnp.float32):
    return condition_encoder_apply(fold_params(params, compute_dtype), x_ncl)


# -----------------------------------------------------------------------------
# Parameter construction (deterministic, PyTorch-equivalent shapes)
# -----------------------------------------------------------------------------
def init_params(key, in_dim, num_hiddens):
    C = num_hiddens
    keys = iter(jax.random.split(key, 64))

    def normal(shape, s=0.1):
        return s * jax.random.normal(next(keys), shape, dtype=jnp.float32)

    def bn(C):
        gamma = 1.0 + normal((C,), 0.05)
        beta = normal((C,), 0.05)
        mean = normal((C,), 0.05)
        var = jax.random.uniform(next(keys), (C,), jnp.float32, 0.5, 1.5)
        return _fold_bn(gamma, beta, mean, var)

    params = {
        "fm_w": normal((C, in_dim, 1)),      # Conv1d(in_dim, C, 1)
        "fm_b": normal((C,)),
    }
    params["fm_scale"], params["fm_shift"] = bn(C)
    for i in (1, 2, 3):
        params[f"d{i}_wm"] = normal((C, C, 4))    # main Conv1d(C, C, 4, 2, 1)
        params[f"d{i}_bm"] = normal((C,))
        params[f"d{i}_scale"], params[f"d{i}_shift"] = bn(C)
        params[f"d{i}_wr"] = normal((C, C, 4))    # residual Conv1d(C, C, 4, 2, 1)
        params[f"d{i}_br"] = normal((C,))
    return params


# -----------------------------------------------------------------------------
# Pure-JAX reference (independent path: lax.conv_general_dilated, un-folded params)
# -----------------------------------------------------------------------------
def _ref_conv1d(x_ncl, w_oik, b, stride, pad):
    y = jax.lax.conv_general_dilated(
        x_ncl, w_oik, window_strides=(stride,), padding=[(pad, pad)],
        dimension_numbers=("NCH", "OIH", "NCH"))
    return y + b[None, :, None]


def reference_forward(params, x_ncl):
    def leaky(x, s):
        return jnp.where(x > 0, x, s * x)

    h = _ref_conv1d(x_ncl, params["fm_w"], params["fm_b"], 1, 0)
    h = h * params["fm_scale"][None, :, None] + params["fm_shift"][None, :, None]
    h = leaky(h, 0.1)
    for i in (1, 2, 3):
        main = _ref_conv1d(h, params[f"d{i}_wm"], params[f"d{i}_bm"], 2, 1)
        main = main * params[f"d{i}_scale"][None, :, None] + params[f"d{i}_shift"][None, :, None]
        res = _ref_conv1d(h, params[f"d{i}_wr"], params[f"d{i}_br"], 2, 1)
        h = leaky(main + res, 0.2)
    return h


# -----------------------------------------------------------------------------
if __name__ == "__main__":
    # ConditionEncoder(in_dim=6, num_hiddens=32, num_residual_layers=2,
    #                  num_residual_hiddens=16, dp=0.1)  -- residual_* unused in forward.
    B, in_dim, L, C = 2, 6, 16, 32

    key = jax.random.PRNGKey(0)
    k_params, k_x = jax.random.split(key)
    params = init_params(k_params, in_dim, C)
    x = jax.random.normal(k_x, (B, in_dim, L), dtype=jnp.float32)   # PyTorch NCL input

    # Host-side one-time fold of BN + residual conv into the matmul weights.
    ops = jax.block_until_ready(fold_params(params, compute_dtype=jnp.float32))

    fwd = jax.jit(condition_encoder_apply)
    out = jax.block_until_ready(fwd(ops, x))

    ref = reference_forward(params, x)
    assert out.shape == (B, C, L // 8), out.shape
    assert jnp.allclose(out, ref, rtol=2e-4, atol=2e-4), float(jnp.max(jnp.abs(out - ref)))

    # TODO(synk): Dropout / training-mode BatchNorm (batch statistics) are not
    # implemented; forward is eval-mode (dropout identity, BN folded affine).
    # TODO(synk): ConvNormRelu residual branch assumed to be a separate Conv1d(k=4,s=2);
    # verify against the real PyTorch class if it differs.
    print("KERNEL_OK")
</pallas_src>

<mosaic_0001>
module attributes {stable_mosaic.version = 11 : i64} {
  func.func @_fused_encoder_kernel(%arg0: i32, %arg1: memref<1x16x6xf32, #tpu.memory_space<vmem>>, %arg2: memref<6x32xf32, #tpu.memory_space<vmem>>, %arg3: memref<3x128x32xf32, #tpu.memory_space<vmem>>, %arg4: memref<4x32xf32, #tpu.memory_space<vmem>>, %arg5: memref<1x2x32xf32, #tpu.memory_space<vmem>>) attributes {dimension_semantics = [#tpu.dimension_semantics<parallel>], iteration_bounds = array<i64: 2>, scalar_prefetch = 0 : i64, scratch_operands = 0 : i64, tpu.core_type = #tpu.core_type<tc>, window_params = [{transform_indices = @transform_0, window_bounds = array<i64: 1, 16, 6>}, {pipeline_mode = #tpu.pipeline_mode<synchronous>, transform_indices = @transform_1, window_bounds = array<i64: 6, 32>}, {pipeline_mode = #tpu.pipeline_mode<synchronous>, transform_indices = @transform_2, window_bounds = array<i64: 3, 128, 32>}, {pipeline_mode = #tpu.pipeline_mode<synchronous>, transform_indices = @transform_3, window_bounds = array<i64: 4, 32>}, {transform_indices = @transform_4, window_bounds = array<i64: 1, 2, 32>}]} {
    %c0 = arith.constant 0 : index
    %c0_0 = arith.constant 0 : index
    %0 = vector.load %arg4[%c0, %c0_0] : memref<4x32xf32, #tpu.memory_space<vmem>>, vector<4x32xf32>
    %c0_1 = arith.constant 0 : index
    %c0_2 = arith.constant 0 : index
    %c0_3 = arith.constant 0 : index
    %1 = vector.load %arg1[%c0_1, %c0_2, %c0_3] : memref<1x16x6xf32, #tpu.memory_space<vmem>>, vector<1x16x6xf32>
    %2 = vector.shape_cast %1 : vector<1x16x6xf32> to vector<16x6xf32>
    %c0_4 = arith.constant 0 : index
    %c0_5 = arith.constant 0 : index
    %3 = vector.load %arg2[%c0_4, %c0_5] : memref<6x32xf32, #tpu.memory_space<vmem>>, vector<6x32xf32>
    %cst = arith.constant dense<0.000000e+00> : vector<16x32xf32>
    %4 = tpu.matmul %2, %3, %cst {dimension_numbers = #tpu.dot_dimension_numbers<[1], [0], [0], [1], [0, 0, 1, 1], [], []>} : vector<16x6xf32>, vector<6x32xf32>, vector<16x32xf32> -> vector<16x32xf32>
    %5 = vector.extract_strided_slice %0 {offsets = [0, 0], sizes = [1, 32], strides = [1, 1]} : vector<4x32xf32> to vector<1x32xf32>
    %6 = vector.broadcast %5 : vector<1x32xf32> to vector<16x32xf32>
    %7 = arith.addf %4, %6 : vector<16x32xf32>
    %cst_6 = arith.constant 0.000000e+00 : f32
    %8 = vector.broadcast %cst_6 : f32 to vector<16x32xf32>
    %9 = arith.cmpf ogt, %7, %8 : vector<16x32xf32>
    %cst_7 = arith.constant 1.000000e-01 : f32
    %10 = vector.broadcast %cst_7 : f32 to vector<16x32xf32>
    %11 = arith.mulf %10, %7 : vector<16x32xf32>
    %12 = arith.select %9, %7, %11 : vector<16x32xi1>, vector<16x32xf32>
    %c0_8 = arith.constant 0 : index
    %c0_9 = arith.constant 0 : index
    %c0_10 = arith.constant 0 : index
    %13 = vector.load %arg3[%c0_8, %c0_9, %c0_10] : memref<3x128x32xf32, #tpu.memory_space<vmem>>, vector<1x128x32xf32>
    %14 = vector.shape_cast %13 : vector<1x128x32xf32> to vector<128x32xf32>
    %15 = vector.extract_strided_slice %0 {offsets = [1, 0], sizes = [1, 32], strides = [1, 1]} : vector<4x32xf32> to vector<1x32xf32>
    %16 = tpu.iota {dimensions = array<i32: 0>} : vector<8x16xi32>
    %17 = tpu.iota {dimensions = array<i32: 1>} : vector<8x16xi32>
    %c2_i32 = arith.constant 2 : i32
    %18 = vector.broadcast %c2_i32 : i32 to vector<8x16xi32>
    %19 = arith.muli %18, %16 : vector<8x16xi32>
    %c-1_i32 = arith.constant -1 : i32
    %20 = vector.broadcast %c-1_i32 : i32 to vector<8x16xi32>
    %21 = arith.addi %19, %20 : vector<8x16xi32>
    %22 = arith.cmpi eq, %17, %21 : vector<8x16xi32>
    %23 = arith.extui %22 : vector<8x16xi1> to vector<8x16xi32>
    %24 = arith.sitofp %23 : vector<8x16xi32> to vector<8x16xf32>
    %cst_11 = arith.constant dense<0.000000e+00> : vector<8x32xf32>
    %25 = tpu.matmul %24, %12, %cst_11 {dimension_numbers = #tpu.dot_dimension_numbers<[1], [0], [0], [1], [0, 0, 1, 1], [], []>} : vector<8x16xf32>, vector<16x32xf32>, vector<8x32xf32> -> vector<8x32xf32>
    %c2_i32_12 = arith.constant 2 : i32
    %26 = vector.broadcast %c2_i32_12 : i32 to vector<8x16xi32>
    %27 = arith.muli %26, %16 : vector<8x16xi32>
    %c0_i32 = arith.constant 0 : i32
    %28 = vector.broadcast %c0_i32 : i32 to vector<8x16xi32>
    %29 = arith.addi %27, %28 : vector<8x16xi32>
    %30 = arith.cmpi eq, %17, %29 : vector<8x16xi32>
    %31 = arith.extui %30 : vector<8x16xi1> to vector<8x16xi32>
    %32 = arith.sitofp %31 : vector<8x16xi32> to vector<8x16xf32>
    %cst_13 = arith.constant dense<0.000000e+00> : vector<8x32xf32>
    %33 = tpu.matmul %32, %12, %cst_13 {dimension_numbers = #tpu.dot_dimension_numbers<[1], [0], [0], [1], [0, 0, 1, 1], [], []>} : vector<8x16xf32>, vector<16x32xf32>, vector<8x32xf32> -> vector<8x32xf32>
    %c2_i32_14 = arith.constant 2 : i32
    %34 = vector.broadcast %c2_i32_14 : i32 to vector<8x16xi32>
    %35 = arith.muli %34, %16 : vector<8x16xi32>
    %c1_i32 = arith.constant 1 : i32
    %36 = vector.broadcast %c1_i32 : i32 to vector<8x16xi32>
    %37 = arith.addi %35, %36 : vector<8x16xi32>
    %38 = arith.cmpi eq, %17, %37 : vector<8x16xi32>
    %39 = arith.extui %38 : vector<8x16xi1> to vector<8x16xi32>
    %40 = arith.sitofp %39 : vector<8x16xi32> to vector<8x16xf32>
    %cst_15 = arith.constant dense<0.000000e+00> : vector<8x32xf32>
    %41 = tpu.matmul %40, %12, %cst_15 {dimension_numbers = #tpu.dot_dimension_numbers<[1], [0], [0], [1], [0, 0, 1, 1], [], []>} : vector<8x16xf32>, vector<16x32xf32>, vector<8x32xf32> -> vector<8x32xf32>
    %c2_i32_16 = arith.constant 2 : i32
    %42 = vector.broadcast %c2_i32_16 : i32 to vector<8x16xi32>
    %43 = arith.muli %42, %16 : vector<8x16xi32>
    %c2_i32_17 = arith.constant 2 : i32
    %44 = vector.broadcast %c2_i32_17 : i32 to vector<8x16xi32>
    %45 = arith.addi %43, %44 : vector<8x16xi32>
    %46 = arith.cmpi eq, %17, %45 : vector<8x16xi32>
    %47 = arith.extui %46 : vector<8x16xi1> to vector<8x16xi32>
    %48 = arith.sitofp %47 : vector<8x16xi32> to vector<8x16xf32>
    %cst_18 = arith.constant dense<0.000000e+00> : vector<8x32xf32>
    %49 = tpu.matmul %48, %12, %cst_18 {dimension_numbers = #tpu.dot_dimension_numbers<[1], [0], [0], [1], [0, 0, 1, 1], [], []>} : vector<8x16xf32>, vector<16x32xf32>, vector<8x32xf32> -> vector<8x32xf32>
    %50 = tpu.concatenate %25, %33, %41, %49 in 1 : vector<8x32xf32>, vector<8x32xf32>, vector<8x32xf32>, vector<8x32xf32> -> vector<8x128xf32>
    %cst_19 = arith.constant dense<0.000000e+00> : vector<8x32xf32>
    %51 = tpu.matmul %50, %14, %cst_19 {dimension_numbers = #tpu.dot_dimension_numbers<[1], [0], [0], [1], [0, 0, 1, 1], [], []>} : vector<8x128xf32>, vector<128x32xf32>, vector<8x32xf32> -> vector<8x32xf32>
    %52 = vector.broadcast %15 : vector<1x32xf32> to vector<8x32xf32>
    %53 = arith.addf %51, %52 : vector<8x32xf32>
    %cst_20 = arith.constant 0.000000e+00 : f32
    %54 = vector.broadcast %cst_20 : f32 to vector<8x32xf32>
    %55 = arith.cmpf ogt, %53, %54 : vector<8x32xf32>
    %cst_21 = arith.constant 2.000000e-01 : f32
    %56 = vector.broadcast %cst_21 : f32 to vector<8x32xf32>
    %57 = arith.mulf %56, %53 : vector<8x32xf32>
    %58 = arith.select %55, %53, %57 : vector<8x32xi1>, vector<8x32xf32>
    %c1 = arith.constant 1 : index
    %c0_22 = arith.constant 0 : index
    %c0_23 = arith.constant 0 : index
    %59 = vector.load %arg3[%c1, %c0_22, %c0_23] : memref<3x128x32xf32, #tpu.memory_space<vmem>>, vector<1x128x32xf32>
    %60 = vector.shape_cast %59 : vector<1x128x32xf32> to vector<128x32xf32>
    %61 = vector.extract_strided_slice %0 {offsets = [2, 0], sizes = [1, 32], strides = [1, 1]} : vector<4x32xf32> to vector<1x32xf32>
    %62 = tpu.iota {dimensions = array<i32: 0>} : vector<4x8xi32>
    %63 = tpu.iota {dimensions = array<i32: 1>} : vector<4x8xi32>
    %c2_i32_24 = arith.constant 2 : i32
    %64 = vector.broadcast %c2_i32_24 : i32 to vector<4x8xi32>
    %65 = arith.muli %64, %62 : vector<4x8xi32>
    %c-1_i32_25 = arith.constant -1 : i32
    %66 = vector.broadcast %c-1_i32_25 : i32 to vector<4x8xi32>
    %67 = arith.addi %65, %66 : vector<4x8xi32>
    %68 = arith.cmpi eq, %63, %67 : vector<4x8xi32>
    %69 = arith.extui %68 : vector<4x8xi1> to vector<4x8xi32>
    %70 = arith.sitofp %69 : vector<4x8xi32> to vector<4x8xf32>
    %cst_26 = arith.constant dense<0.000000e+00> : vector<4x32xf32>
    %71 = tpu.matmul %70, %58, %cst_26 {dimension_numbers = #tpu.dot_dimension_numbers<[1], [0], [0], [1], [0, 0, 1, 1], [], []>} : vector<4x8xf32>, vector<8x32xf32>, vector<4x32xf32> -> vector<4x32xf32>
    %c2_i32_27 = arith.constant 2 : i32
    %72 = vector.broadcast %c2_i32_27 : i32 to vector<4x8xi32>
    %73 = arith.muli %72, %62 : vector<4x8xi32>
    %c0_i32_28 = arith.constant 0 : i32
    %74 = vector.broadcast %c0_i32_28 : i32 to vector<4x8xi32>
    %75 = arith.addi %73, %74 : vector<4x8xi32>
    %76 = arith.cmpi eq, %63, %75 : vector<4x8xi32>
    %77 = arith.extui %76 : vector<4x8xi1> to vector<4x8xi32>
    %78 = arith.sitofp %77 : vector<4x8xi32> to vector<4x8xf32>
    %cst_29 = arith.constant dense<0.000000e+00> : vector<4x32xf32>
    %79 = tpu.matmul %78, %58, %cst_29 {dimension_numbers = #tpu.dot_dimension_numbers<[1], [0], [0], [1], [0, 0, 1, 1], [], []>} : vector<4x8xf32>, vector<8x32xf32>, vector<4x32xf32> -> vector<4x32xf32>
    %c2_i32_30 = arith.constant 2 : i32
    %80 = vector.broadcast %c2_i32_30 : i32 to vector<4x8xi32>
    %81 = arith.muli %80, %62 : vector<4x8xi32>
    %c1_i32_31 = arith.constant 1 : i32
    %82 = vector.broadcast %c1_i32_31 : i32 to vector<4x8xi32>
    %83 = arith.addi %81, %82 : vector<4x8xi32>
    %84 = arith.cmpi eq, %63, %83 : vector<4x8xi32>
    %85 = arith.extui %84 : vector<4x8xi1> to vector<4x8xi32>
    %86 = arith.sitofp %85 : vector<4x8xi32> to vector<4x8xf32>
    %cst_32 = arith.constant dense<0.000000e+00> : vector<4x32xf32>
    %87 = tpu.matmul %86, %58, %cst_32 {dimension_numbers = #tpu.dot_dimension_numbers<[1], [0], [0], [1], [0, 0, 1, 1], [], []>} : vector<4x8xf32>, vector<8x32xf32>, vector<4x32xf32> -> vector<4x32xf32>
    %c2_i32_33 = arith.constant 2 : i32
    %88 = vector.broadcast %c2_i32_33 : i32 to vector<4x8xi32>
    %89 = arith.muli %88, %62 : vector<4x8xi32>
    %c2_i32_34 = arith.constant 2 : i32
    %90 = vector.broadcast %c2_i32_34 : i32 to vector<4x8xi32>
    %91 = arith.addi %89, %90 : vector<4x8xi32>
    %92 = arith.cmpi eq, %63, %91 : vector<4x8xi32>
    %93 = arith.extui %92 : vector<4x8xi1> to vector<4x8xi32>
    %94 = arith.sitofp %93 : vector<4x8xi32> to vector<4x8xf32>
    %cst_35 = arith.constant dense<0.000000e+00> : vector<4x32xf32>
    %95 = tpu.matmul %94, %58, %cst_35 {dimension_numbers = #tpu.dot_dimension_numbers<[1], [0], [0], [1], [0, 0, 1, 1], [], []>} : vector<4x8xf32>, vector<8x32xf32>, vector<4x32xf32> -> vector<4x32xf32>
    %96 = tpu.concatenate %71, %79, %87, %95 in 1 : vector<4x32xf32>, vector<4x32xf32>, vector<4x32xf32>, vector<4x32xf32> -> vector<4x128xf32>
    %cst_36 = arith.constant dense<0.000000e+00> : vector<4x32xf32>
    %97 = tpu.matmul %96, %60, %cst_36 {dimension_numbers = #tpu.dot_dimension_numbers<[1], [0], [0], [1], [0, 0, 1, 1], [], []>} : vector<4x128xf32>, vector<128x32xf32>, vector<4x32xf32> -> vector<4x32xf32>
    %98 = vector.broadcast %61 : vector<1x32xf32> to vector<4x32xf32>
    %99 = arith.addf %97, %98 : vector<4x32xf32>
    %cst_37 = arith.constant 0.000000e+00 : f32
    %100 = vector.broadcast %cst_37 : f32 to vector<4x32xf32>
    %101 = arith.cmpf ogt, %99, %100 : vector<4x32xf32>
    %cst_38 = arith.constant 2.000000e-01 : f32
    %102 = vector.broadcast %cst_38 : f32 to vector<4x32xf32>
    %103 = arith.mulf %102, %99 : vector<4x32xf32>
    %104 = arith.select %101, %99, %103 : vector<4x32xi1>, vector<4x32xf32>
    %c2 = arith.constant 2 : index
    %c0_39 = arith.constant 0 : index
    %c0_40 = arith.constant 0 : index
    %105 = vector.load %arg3[%c2, %c0_39, %c0_40] : memref<3x128x32xf32, #tpu.memory_space<vmem>>, vector<1x128x32xf32>
    %106 = vector.shape_cast %105 : vector<1x128x32xf32> to vector<128x32xf32>
    %107 = vector.extract_strided_slice %0 {offsets = [3, 0], sizes = [1, 32], strides = [1, 1]} : vector<4x32xf32> to vector<1x32xf32>
    %108 = tpu.iota {dimensions = array<i32: 0>} : vector<2x4xi32>
    %109 = tpu.iota {dimensions = array<i32: 1>} : vector<2x4xi32>
    %c2_i32_41 = arith.constant 2 : i32
    %110 = vector.broadcast %c2_i32_41 : i32 to vector<2x4xi32>
    %111 = arith.muli %110, %108 : vector<2x4xi32>
    %c-1_i32_42 = arith.constant -1 : i32
    %112 = vector.broadcast %c-1_i32_42 : i32 to vector<2x4xi32>
    %113 = arith.addi %111, %112 : vector<2x4xi32>
    %114 = arith.cmpi eq, %109, %113 : vector<2x4xi32>
    %115 = arith.extui %114 : vector<2x4xi1> to vector<2x4xi32>
    %116 = arith.sitofp %115 : vector<2x4xi32> to vector<2x4xf32>
    %cst_43 = arith.constant dense<0.000000e+00> : vector<2x32xf32>
    %117 = tpu.matmul %116, %104, %cst_43 {dimension_numbers = #tpu.dot_dimension_numbers<[1], [0], [0], [1], [0, 0, 1, 1], [], []>} : vector<2x4xf32>, vector<4x32xf32>, vector<2x32xf32> -> vector<2x32xf32>
    %c2_i32_44 = arith.constant 2 : i32
    %118 = vector.broadcast %c2_i32_44 : i32 to vector<2x4xi32>
    %119 = arith.muli %118, %108 : vector<2x4xi32>
    %c0_i32_45 = arith.constant 0 : i32
    %120 = vector.broadcast %c0_i32_45 : i32 to vector<2x4xi32>
    %121 = arith.addi %119, %120 : vector<2x4xi32>
    %122 = arith.cmpi eq, %109, %121 : vector<2x4xi32>
    %123 = arith.extui %122 : vector<2x4xi1> to vector<2x4xi32>
    %124 = arith.sitofp %123 : vector<2x4xi32> to vector<2x4xf32>
    %cst_46 = arith.constant dense<0.000000e+00> : vector<2x32xf32>
    %125 = tpu.matmul %124, %104, %cst_46 {dimension_numbers = #tpu.dot_dimension_numbers<[1], [0], [0], [1], [0, 0, 1, 1], [], []>} : vector<2x4xf32>, vector<4x32xf32>, vector<2x32xf32> -> vector<2x32xf32>
    %c2_i32_47 = arith.constant 2 : i32
    %126 = vector.broadcast %c2_i32_47 : i32 to vector<2x4xi32>
    %127 = arith.muli %126, %108 : vector<2x4xi32>
    %c1_i32_48 = arith.constant 1 : i32
    %128 = vector.broadcast %c1_i32_48 : i32 to vector<2x4xi32>
    %129 = arith.addi %127, %128 : vector<2x4xi32>
    %130 = arith.cmpi eq, %109, %129 : vector<2x4xi32>
    %131 = arith.extui %130 : vector<2x4xi1> to vector<2x4xi32>
    %132 = arith.sitofp %131 : vector<2x4xi32> to vector<2x4xf32>
    %cst_49 = arith.constant dense<0.000000e+00> : vector<2x32xf32>
    %133 = tpu.matmul %132, %104, %cst_49 {dimension_numbers = #tpu.dot_dimension_numbers<[1], [0], [0], [1], [0, 0, 1, 1], [], []>} : vector<2x4xf32>, vector<4x32xf32>, vector<2x32xf32> -> vector<2x32xf32>
    %c2_i32_50 = arith.constant 2 : i32
    %134 = vector.broadcast %c2_i32_50 : i32 to vector<2x4xi32>
    %135 = arith.muli %134, %108 : vector<2x4xi32>
    %c2_i32_51 = arith.constant 2 : i32
    %136 = vector.broadcast %c2_i32_51 : i32 to vector<2x4xi32>
    %137 = arith.addi %135, %136 : vector<2x4xi32>
    %138 = arith.cmpi eq, %109, %137 : vector<2x4xi32>
    %139 = arith.extui %138 : vector<2x4xi1> to vector<2x4xi32>
    %140 = arith.sitofp %139 : vector<2x4xi32> to vector<2x4xf32>
    %cst_52 = arith.constant dense<0.000000e+00> : vector<2x32xf32>
    %141 = tpu.matmul %140, %104, %cst_52 {dimension_numbers = #tpu.dot_dimension_numbers<[1], [0], [0], [1], [0, 0, 1, 1], [], []>} : vector<2x4xf32>, vector<4x32xf32>, vector<2x32xf32> -> vector<2x32xf32>
    %142 = tpu.concatenate %117, %125, %133, %141 in 1 : vector<2x32xf32>, vector<2x32xf32>, vector<2x32xf32>, vector<2x32xf32> -> vector<2x128xf32>
    %cst_53 = arith.constant dense<0.000000e+00> : vector<2x32xf32>
    %143 = tpu.matmul %142, %106, %cst_53 {dimension_numbers = #tpu.dot_dimension_numbers<[1], [0], [0], [1], [0, 0, 1, 1], [], []>} : vector<2x128xf32>, vector<128x32xf32>, vector<2x32xf32> -> vector<2x32xf32>
    %144 = vector.broadcast %107 : vector<1x32xf32> to vector<2x32xf32>
    %145 = arith.addf %143, %144 : vector<2x32xf32>
    %cst_54 = arith.constant 0.000000e+00 : f32
    %146 = vector.broadcast %cst_54 : f32 to vector<2x32xf32>
    %147 = arith.cmpf ogt, %145, %146 : vector<2x32xf32>
    %cst_55 = arith.constant 2.000000e-01 : f32
    %148 = vector.broadcast %cst_55 : f32 to vector<2x32xf32>
    %149 = arith.mulf %148, %145 : vector<2x32xf32>
    %150 = arith.select %147, %145, %149 : vector<2x32xi1>, vector<2x32xf32>
    %c0_56 = arith.constant 0 : index
    %c0_57 = arith.constant 0 : index
    %c0_58 = arith.constant 0 : index
    %151 = vector.load %arg5[%c0_56, %c0_57, %c0_58] : memref<1x2x32xf32, #tpu.memory_space<vmem>>, vector<1x2x32xf32>
    %152 = vector.shape_cast %151 : vector<1x2x32xf32> to vector<2x32xf32>
    %153 = vector.shape_cast %150 : vector<2x32xf32> to vector<1x2x32xf32>
    tpu.vector_store %arg5[%c0_56, %c0_57, %c0_58], %153 {strides = array<i32>} : memref<1x2x32xf32, #tpu.memory_space<vmem>>, vector<1x2x32xf32>,
    return
  }
  func.func @transform_0(%arg0: i32) -> (i32, i32, i32) {
    %c0_i32 = arith.constant 0 : i32
    %c0_i32_0 = arith.constant 0 : i32
    %c0_i32_1 = arith.constant 0 : i32
    return %arg0, %c0_i32, %c0_i32_0 : i32, i32, i32
  }
  func.func @transform_1(%arg0: i32) -> (i32, i32) {
    %c0_i32 = arith.constant 0 : i32
    %c0_i32_0 = arith.constant 0 : i32
    %c0_i32_1 = arith.constant 0 : i32
    return %c0_i32, %c0_i32_0 : i32, i32
  }
  func.func @transform_2(%arg0: i32) -> (i32, i32, i32) {
    %c0_i32 = arith.constant 0 : i32
    %c0_i32_0 = arith.constant 0 : i32
    %c0_i32_1 = arith.constant 0 : i32
    %c0_i32_2 = arith.constant 0 : i32
    return %c0_i32, %c0_i32_0, %c0_i32_1 : i32, i32, i32
  }
  func.func @transform_3(%arg0: i32) -> (i32, i32) {
    %c0_i32 = arith.constant 0 : i32
    %c0_i32_0 = arith.constant 0 : i32
    %c0_i32_1 = arith.constant 0 : i32
    return %c0_i32, %c0_i32_0 : i32, i32
  }
  func.func @transform_4(%arg0: i32) -> (i32, i32, i32) {
    %c0_i32 = arith.constant 0 : i32
    %c0_i32_0 = arith.constant 0 : i32
    %c0_i32_1 = arith.constant 0 : i32
    return %arg0, %c0_i32, %c0_i32_0 : i32, i32, i32
  }
}

</mosaic_0001>

<llo_original>
// kernel: condition_encoder_apply.1
$region0: #{condition_encoder_apply.1}
  #allocation0 [shape = 'u32[]', space=smem, size = 0x4, offset = 0x4, fixed_abs, tag = 'smem constant byte address 0x4 - core index']
  #allocation1 [shape = 'u32[144,128]{1,0:T(1,128)}', space=vmem, size = 0x12000, scoped, tag = 'internal scratch']
  %s0 = inlined_call_operand.vmem [shape: f32[2,16,6], index: 0, kind: input, shape index: {}]
  %s1 = inlined_call_operand.vmem [shape: f32[6,32], index: 1, kind: input, shape index: {}]
  %s2 = inlined_call_operand.vmem [shape: f32[3,128,32], index: 2, kind: input, shape index: {}]
  %s3 = inlined_call_operand.vmem [shape: f32[4,32], index: 3, kind: input, shape index: {}]
  %s4 = inlined_call_operand.hbm [shape: f32[2,2,32], index: 4, kind: output, shape index: {}]
  %s5 = sld [smem:[#allocation0]]
  $region49: #{condition_encoder_apply.1} parent=0
    _
  %s7 = ssub.s32 1, %s5
  %s8 = scalar_select 0, %s7, %s5
  $region1: #{condition_encoder_apply.1} parent=0
    #allocation2 [shape = 'u8[2048]{0}', space=vmem, size = 0x800, scoped, tag = 'output window, operand 0']
    #allocation3 [shape = 's32[2]{0}', space=sflag, size = 0x8, scoped, tag = 'scoped memory for condition_encoder_apply.1']
    %9 = vsyncpa [#allocation3], 0
    %s10 = scalar_lea.sflag [#allocation3], 1
    %11 = vsyncpa %s10, 0
    loop: start=0, step=1, limit=4
    $region2: #{condition_encoder_apply.1} parent=1 // loop_pre_header
      _
    $region3: #{condition_encoder_apply.1} parent=1 // loop_header
      %s13 = sphi 0, %s17
      %p14 = scmp.ge.s32.totalorder %s13, 4
      %s23 = sphi 0, %s25
      %s26 = sphi 0, %s23
      %s27 = sphi 0, %s26
      %s43 = sphi 0, %s27
      %s47 = sphi 0, %s47
      %s49 = sphi 0, %s47
      %s50 = sphi 0, %s49
      %s64 = sphi 0, %s50
      %s68 = sphi 0, %s68
      %s70 = sphi 0, %s68
      %s71 = sphi 0, %s70
      %s85 = sphi 0, %s71
      %s89 = sphi 0, %s89
      %s91 = sphi 0, %s89
      %s92 = sphi 0, %s91
      %s106 = sphi 0, %s92
      %s112 = sphi 0, %s114
      %s115 = sphi 0, %s112
      %s116 = sphi 0, %s115
      %s132 = sphi 0, %s116
    $region4: #{condition_encoder_apply.1} parent=1 // loop_header_branch
      %16 = sbr.rel (%p14) target = $region8
    $region5: #{condition_encoder_apply.1} parent=1 // loop_body
      %s18 = ssub.s32 %s13, 1
      %s19 = ssub.s32 %s13, 2
      %s20 = sadd.s32 %s13, 1
      %s21 = ssub.s32 %s13, %s20
      %p22 = scmp.eq.s32.totalorder %s21, 0
      %s24 = sadd.s32 %s23, 1
      %s25 = scalar_select %p22, %s23, %s24
      %p28 = pneg %p22
      %p29 = scmp.eq.s32.totalorder %s13, 1
      %p30 = por %p28, %p29
      %p31 = scmp.ne.s32.totalorder %s23, %s26
      %p32 = scmp.eq.s32.totalorder %s13, 0
      %p33 = por %p31, %p32
      %p34 = scmp.ne.s32.totalorder %s23, %s26
      %p35 = scmp.eq.s32.totalorder %s18, 1
      %p36 = por %p34, %p35
      %p37 = scmp.ne.s32.totalorder %s26, %s27
      %p38 = scmp.eq.s32.totalorder %s18, 0
      %p39 = por %p37, %p38
      %p40 = scmp.ne.s32.totalorder %s26, %s27
      %p41 = scmp.eq.s32.totalorder %s19, 1
      %p42 = por %p40, %p41
      %p44 = scmp.ne.s32.totalorder %s27, %s43
      %p45 = scmp.eq.s32.totalorder %s19, 0
      %p46 = por %p44, %p45
      %s48 = sadd.s32 %s47, 1
      %p51 = scmp.eq.s32.totalorder %s13, 1
      %p52 = scmp.ne.s32.totalorder %s47, %s49
      %p53 = scmp.eq.s32.totalorder %s13, 0
      %p54 = por %p52, %p53
      %p55 = scmp.ne.s32.totalorder %s47, %s49
      %p56 = scmp.eq.s32.totalorder %s18, 1
      %p57 = por %p55, %p56
      %p58 = scmp.ne.s32.totalorder %s49, %s50
      %p59 = scmp.eq.s32.totalorder %s18, 0
      %p60 = por %p58, %p59
      %p61 = scmp.ne.s32.totalorder %s49, %s50
      %p62 = scmp.eq.s32.totalorder %s19, 1
      %p63 = por %p61, %p62
      %p65 = scmp.ne.s32.totalorder %s50, %s64
      %p66 = scmp.eq.s32.totalorder %s19, 0
      %p67 = por %p65, %p66
      %s69 = sadd.s32 %s68, 1
      %p72 = scmp.eq.s32.totalorder %s13, 1
      %p73 = scmp.ne.s32.totalorder %s68, %s70
      %p74 = scmp.eq.s32.totalorder %s13, 0
      %p75 = por %p73, %p74
      %p76 = scmp.ne.s32.totalorder %s68, %s70
      %p77 = scmp.eq.s32.totalorder %s18, 1
      %p78 = por %p76, %p77
      %p79 = scmp.ne.s32.totalorder %s70, %s71
      %p80 = scmp.eq.s32.totalorder %s18, 0
      %p81 = por %p79, %p80
      %p82 = scmp.ne.s32.totalorder %s70, %s71
      %p83 = scmp.eq.s32.totalorder %s19, 1
      %p84 = por %p82, %p83
      %p86 = scmp.ne.s32.totalorder %s71, %s85
      %p87 = scmp.eq.s32.totalorder %s19, 0
      %p88 = por %p86, %p87
      %s90 = sadd.s32 %s89, 1
      %p93 = scmp.eq.s32.totalorder %s13, 1
      %p94 = scmp.ne.s32.totalorder %s89, %s91
      %p95 = scmp.eq.s32.totalorder %s13, 0
      %p96 = por %p94, %p95
      %p97 = scmp.ne.s32.totalorder %s89, %s91
      %p98 = scmp.eq.s32.totalorder %s18, 1
      %p99 = por %p97, %p98
      %p100 = scmp.ne.s32.totalorder %s91, %s92
      %p101 = scmp.eq.s32.totalorder %s18, 0
      %p102 = por %p100, %p101
      %p103 = scmp.ne.s32.totalorder %s91, %s92
      %p104 = scmp.eq.s32.totalorder %s19, 1
      %p105 = por %p103, %p104
      %p107 = scmp.ne.s32.totalorder %s92, %s106
      %p108 = scmp.eq.s32.totalorder %s19, 0
      %p109 = por %p107, %p108
      %s110 = ssub.s32 %s13, %s20
      %p111 = scmp.eq.s32.totalorder %s110, 0
      %s113 = sadd.s32 %s112, 1
      %s114 = scalar_select %p111, %s112, %s113
      %p117 = pneg %p111
      %p118 = scmp.eq.s32.totalorder %s13, 1
      %p119 = por %p117, %p118
      %p120 = scmp.ne.s32.totalorder %s112, %s115
      %p121 = scmp.eq.s32.totalorder %s13, 0
      %p122 = por %p120, %p121
      %p123 = scmp.ne.s32.totalorder %s112, %s115
      %p124 = scmp.eq.s32.totalorder %s18, 1
      %p125 = por %p123, %p124
      %p126 = scmp.ne.s32.totalorder %s115, %s116
      %p127 = scmp.eq.s32.totalorder %s18, 0
      %p128 = por %p126, %p127
      %p129 = scmp.ne.s32.totalorder %s115, %s116
      %p130 = scmp.eq.s32.totalorder %s19, 1
      %p131 = por %p129, %p130
      %p133 = scmp.ne.s32.totalorder %s116, %s132
      %p134 = scmp.eq.s32.totalorder %s19, 0
      %p135 = por %p133, %p134
      %p136 = scmp.le.s32.totalorder 1, %s13
      %p137 = scmp.lt.s32.totalorder %s13, 3
      %p138 = pnand %p136, %p137
      %p139 = pneg %p138
      // Predicated region
      $region9: #{condition_encoder_apply.1} parent=5 // pred_check
        _
      $region10: #{condition_encoder_apply.1} parent=5 // pred_check_branch
        %141 = sbr.rel (%p138) target = $region12
      $region11: #{condition_encoder_apply.1} parent=5 // pred_region
        %s142 = ssub.s32 %s13, 1
        // Predicated region
        $region13: #{condition_encoder_apply.1} parent=11 // pred_check
          %p143 = pneg %p60
        $region14: #{condition_encoder_apply.1} parent=11 // pred_check_branch
          %145 = sbr.rel (%p143) target = $region16
        $region15: #{condition_encoder_apply.1} parent=11 // pred_region
          _
        $region16: #{condition_encoder_apply.1} parent=11 // pred_fallthru
          _
        // Predicated region
        $region17: #{condition_encoder_apply.1} parent=11 // pred_check
          %p146 = pneg %p81
        $region18: #{condition_encoder_apply.1} parent=11 // pred_check_branch
          %148 = sbr.rel (%p146) target = $region20
        $region19: #{condition_encoder_apply.1} parent=11 // pred_region
          _
        $region20: #{condition_encoder_apply.1} parent=11 // pred_fallthru
          _
        // Predicated region
        $region21: #{condition_encoder_apply.1} parent=11 // pred_check
          %p149 = pneg %p102
        $region22: #{condition_encoder_apply.1} parent=11 // pred_check_branch
          %151 = sbr.rel (%p149) target = $region24
        $region23: #{condition_encoder_apply.1} parent=11 // pred_region
          _
        $region24: #{condition_encoder_apply.1} parent=11 // pred_fallthru
          _
      $region12: #{condition_encoder_apply.1} parent=5 // pred_fallthru
        _
      %p152 = scmp.lt.s32.totalorder %s13, 2
      // Predicated region
      $region25: #{condition_encoder_apply.1} parent=5 // pred_check
        %p153 = pneg %p152
      $region26: #{condition_encoder_apply.1} parent=5 // pred_check_branch
        %155 = sbr.rel (%p153) target = $region28
      $region27: #{condition_encoder_apply.1} parent=5 // pred_region
        // Predicated region
        $region29: #{condition_encoder_apply.1} parent=27 // pred_check
          %p156 = pneg %p33
        $region30: #{condition_encoder_apply.1} parent=27 // pred_check_branch
          %158 = sbr.rel (%p156) target = $region32
        $region31: #{condition_encoder_apply.1} parent=27 // pred_region
          %p159 = scmp.lt.s32.totalorder %s13, 1
          %s160 = scalar_select %p159, %s13, 1
          %s161 = smul.addr %s160, 2
          %s162 = smul.addr %s161, 8
          %s163 = scalar_lea.vmem %s0, %s162
        $region32: #{condition_encoder_apply.1} parent=27 // pred_fallthru
          _
      $region28: #{condition_encoder_apply.1} parent=5 // pred_fallthru
        _
      %p164 = scmp.le.s32.totalorder 1, %s13
      %p165 = scmp.lt.s32.totalorder %s13, 3
      %p166 = pnand %p164, %p165
      %p167 = pneg %p166
      // Predicated region
      $region33: #{condition_encoder_apply.1} parent=5 // pred_check
        _
      $region34: #{condition_encoder_apply.1} parent=5 // pred_check_branch
        %169 = sbr.rel (%p166) target = $region36
      $region35: #{condition_encoder_apply.1} parent=5 // pred_region
        %s170 = ssub.s32 %s13, 1
        %p171 = scmp.lt.s32.totalorder %s18, 1
        %s172 = scalar_select %p171, %s18, 1
        %s173 = smul.addr %s172, 2
        %s174 = smul.addr %s173, 8
        %s175 = scalar_lea.vmem %s0, %s174
        %p176 = pneg %p39
        %p177 = pneg %p36
        %p178 = pneg %p60
        %p179 = pneg %p57
        %p180 = pneg %p81
        %p181 = pneg %p78
        %p182 = pneg %p102
        %p183 = pneg %p99
        %p184 = pneg %p128
        %p185 = pneg %p125
        %s186 = sand.u32 %s115, 1
        %s187 = scalar_lea.sflag [#allocation3], %s186
        %s188 = sand.u32 %s115, 1
        %s189 = smul.addr %s188, 2
        %s190 = scalar_lea.vmem [#allocation2], %s189
        %p191 = scmp.lt.s32.totalorder %s18, 1
        %s192 = scalar_select %p191, %s18, 1
        %s193 = smul.addr %s192, 2
        %s194 = smul.addr %s193, 8
        %s195 = scalar_lea.vmem %s0, %s194
        %v196 = vld [vmem:[%s3] sm:$0xf]
        %v197 = vld [vmem:[%s195] sm:$0xff]
        %v198 = vld [vmem:[%s195 + $0x8] sm:$0xff]
        %v199 = vld [vmem:[%s1] sm:$0x3f]
        %v200 = vlaneseq
        %v201 = vshrl.u32 %v200, 7
        %v202 = vsub.s32 0, %v201
        %v203 = vrot.slane %v196, %v202
        %vm204 = vcmask 48128
        %v206 = vsel %vm204, %v197, 0
        %v209 = vsel %vm204, %v198, 0
        %vm211 = vcmask 1045504
        %v213 = vsel %vm211, %v199, 0
        %215 = vmatprep.subr.mxu0 0.0
        %216 = vmatpush1.msra.mxu0 0.0
        %217 = vmatprep.subr.mxu0 0.0
        %218 = vmatpush1.msra.mxu0 0.0
        %219 = vmatprep.subr.mxu0 0.0
        %220 = vmatpush1.msra.mxu0 0.0
        %221 = vmatprep.subr.mxu0 0.0
        %222 = vmatpush1.msra.mxu0 0.0
        %223 = vmatprep.subr.mxu0 0.0
        %224 = vmatpush1.msra.mxu0 0.0
        %225 = vmatprep.subr.mxu0 0.0
        %226 = vmatpush1.msra.mxu0 0.0
        %227 = vmatprep.subr.mxu0 0.0
        %228 = vmatpush1.msra.mxu0 0.0
        %229 = vmatprep.subr.mxu0 0.0
        %230 = vmatpush1.msra.mxu0 0.0
        %231 = vmatprep.subr.mxu0 0.0
        %232 = vmatpush1.msra.mxu0 0.0
        %233 = vmatprep.subr.mxu0 0.0
        %234 = vmatpush1.msra.mxu0 0.0
        %235 = vmatprep.subr.mxu0 0.0
        %236 = vmatpush1.msra.mxu0 0.0
        %237 = vmatprep.subr.mxu0 0.0
        %238 = vmatpush1.msra.mxu0 0.0
        %239 = vmatprep.subr.mxu0 0.0
        %240 = vmatpush1.msra.mxu0 0.0
        %241 = vmatprep.subr.mxu0 0.0
        %242 = vmatpush1.msra.mxu0 0.0
        %243 = vmatprep.subr.mxu0 0.0
        %244 = vmatpush1.msra.mxu0 0.0
        %245 = vmatprep.subr.mxu0 0.0
        %246 = vmatpush1.msra.mxu0 %v213
        %247 = vmatprep.subr.mxu0 0.0
        %248 = vmatpush2.msra.mxu0 0.0
        %249 = vmatprep.subr.mxu0 0.0
        %250 = vmatpush2.msra.mxu0 0.0
        %251 = vmatprep.subr.mxu0 0.0
        %252 = vmatpush2.msra.mxu0 0.0
        %253 = vmatprep.subr.mxu0 0.0
        %254 = vmatpush2.msra.mxu0 0.0
        %255 = vmatprep.subr.mxu0 0.0
        %256 = vmatpush2.msra.mxu0 0.0
        %257 = vmatprep.subr.mxu0 0.0
        %258 = vmatpush2.msra.mxu0 0.0
        %259 = vmatprep.subr.mxu0 0.0
        %260 = vmatpush2.msra.mxu0 0.0
        %261 = vmatprep.subr.mxu0 0.0
        %262 = vmatpush2.msra.mxu0 0.0
        %263 = vmatprep.subr.mxu0 0.0
        %264 = vmatpush2.msra.mxu0 0.0
        %265 = vmatprep.subr.mxu0 0.0
        %266 = vmatpush2.msra.mxu0 0.0
        %267 = vmatprep.subr.mxu0 0.0
        %268 = vmatpush2.msra.mxu0 0.0
        %269 = vmatprep.subr.mxu0 0.0
        %270 = vmatpush2.msra.mxu0 0.0
        %271 = vmatprep.subr.mxu0 0.0
        %272 = vmatpush2.msra.mxu0 0.0
        %273 = vmatprep.subr.mxu0 0.0
        %274 = vmatpush2.msra.mxu0 0.0
        %275 = vmatprep.subr.mxu0 0.0
        %276 = vmatpush2.msra.mxu0 0.0
        %277 = vmatprep.subr.mxu0 0.0
        %278 = vmatpush2.msra.mxu0 0.0
        %279 = vmatprep.mubr.f32.mxu0 0.0
        %280 = vmatmul.mubr.f32.gmra.mxu0 %v206
        %v281 = vpop.f32.mrf.mxu0
        %v282 = vadd.f32 %v203, %v281
        %v283 = vpop.f32.mrf.mxu0
        %284 = vmatprep.mubr.f32.mxu0 0.0
        %285 = vmatmul.mubr.f32.gmra.mxu0 %v209
        %v286 = vpop.f32.mrf.mxu0
        %v287 = vadd.f32 %v203, %v286
        %v288 = vpop.f32.mrf.mxu0
        %289 = vdwg.mxu0
        %vm290 = vcmp.gt.f32.partialorder %v282, 0.0
        %vm291 = vcmp.gt.f32.partialorder %v287, 0.0
        %v292 = vmul.f32 %v282, 0.1
        %v293 = vmul.f32 %v287, 0.1
        %v294 = vsel %vm290, %v282, %v292
        %v295 = vsel %vm291, %v287, %v293
        %v296 = vld [vmem:[%s2] sm:$0xff]
        %v297 = vld [vmem:[%s2 + $0x8] sm:$0xff]
        %v298 = vld [vmem:[%s2 + $0x10] sm:$0xff]
        %v299 = vld [vmem:[%s2 + $0x18] sm:$0xff]
        %v300 = vld [vmem:[%s2 + $0x20] sm:$0xff]
        %v301 = vld [vmem:[%s2 + $0x28] sm:$0xff]
        %v302 = vld [vmem:[%s2 + $0x30] sm:$0xff]
        %v303 = vld [vmem:[%s2 + $0x38] sm:$0xff]
        %v304 = vld [vmem:[%s2 + $0x40] sm:$0xff]
        %v305 = vld [vmem:[%s2 + $0x48] sm:$0xff]
        %v306 = vld [vmem:[%s2 + $0x50] sm:$0xff]
        %v307 = vld [vmem:[%s2 + $0x58] sm:$0xff]
        %v308 = vld [vmem:[%s2 + $0x60] sm:$0xff]
        %v309 = vld [vmem:[%s2 + $0x68] sm:$0xff]
        %v310 = vld [vmem:[%s2 + $0x70] sm:$0xff]
        %v311 = vld [vmem:[%s2 + $0x78] sm:$0xff]
        %v312 = vlaneseq
        %v313 = vshrl.u32 %v312, 7
        %v314 = vlaneseq
        %v315 = vand.u32 %v314, 127
        %v316 = vmul.u32 %v313, 2
        %v317 = vadd.s32 %v316, 4294967295
        %vm318 = vcmp.eq.s32.totalorder %v315, %v317
        %v319 = vsel %vm318, 1, 0
        %v320 = vcvt.s32.f32 %v319
        %vm321 = vcmask 130048
        %v323 = vsel %vm321, %v320, 0
        %325 = vmatprep.subr.mxu0 0.0
        %326 = vmatpush1.msra.mxu0 0.0
        %327 = vmatprep.subr.mxu0 0.0
        %328 = vmatpush1.msra.mxu0 0.0
        %329 = vmatprep.subr.mxu0 0.0
        %330 = vmatpush1.msra.mxu0 0.0
        %331 = vmatprep.subr.mxu0 0.0
        %332 = vmatpush1.msra.mxu0 0.0
        %333 = vmatprep.subr.mxu0 0.0
        %334 = vmatpush1.msra.mxu0 0.0
        %335 = vmatprep.subr.mxu0 0.0
        %336 = vmatpush1.msra.mxu0 0.0
        %337 = vmatprep.subr.mxu0 0.0
        %338 = vmatpush1.msra.mxu0 0.0
        %339 = vmatprep.subr.mxu0 0.0
        %340 = vmatpush1.msra.mxu0 0.0
        %341 = vmatprep.subr.mxu0 0.0
        %342 = vmatpush1.msra.mxu0 0.0
        %343 = vmatprep.subr.mxu0 0.0
        %344 = vmatpush1.msra.mxu0 0.0
        %345 = vmatprep.subr.mxu0 0.0
        %346 = vmatpush1.msra.mxu0 0.0
        %347 = vmatprep.subr.mxu0 0.0
        %348 = vmatpush1.msra.mxu0 0.0
        %349 = vmatprep.subr.mxu0 0.0
        %350 = vmatpush1.msra.mxu0 0.0
        %351 = vmatprep.subr.mxu0 0.0
        %352 = vmatpush1.msra.mxu0 0.0
        %353 = vmatprep.subr.mxu0 0.0
        %354 = vmatpush1.msra.mxu0 %v295
        %355 = vmatprep.subr.mxu0 0.0
        %356 = vmatpush1.msra.mxu0 %v294
        %357 = vmatprep.subr.mxu0 0.0
        %358 = vmatpush2.msra.mxu0 0.0
        %359 = vmatprep.subr.mxu0 0.0
        %360 = vmatpush2.msra.mxu0 0.0
        %361 = vmatprep.subr.mxu0 0.0
        %362 = vmatpush2.msra.mxu0 0.0
        %363 = vmatprep.subr.mxu0 0.0
        %364 = vmatpush2.msra.mxu0 0.0
        %365 = vmatprep.subr.mxu0 0.0
        %366 = vmatpush2.msra.mxu0 0.0
        %367 = vmatprep.subr.mxu0 0.0
        %368 = vmatpush2.msra.mxu0 0.0
        %369 = vmatprep.subr.mxu0 0.0
        %370 = vmatpush2.msra.mxu0 0.0
        %371 = vmatprep.subr.mxu0 0.0
        %372 = vmatpush2.msra.mxu0 0.0
        %373 = vmatprep.subr.mxu0 0.0
        %374 = vmatpush2.msra.mxu0 0.0
        %375 = vmatprep.subr.mxu0 0.0
        %376 = vmatpush2.msra.mxu0 0.0
        %377 = vmatprep.subr.mxu0 0.0
        %378 = vmatpush2.msra.mxu0 0.0
        %379 = vmatprep.subr.mxu0 0.0
        %380 = vmatpush2.msra.mxu0 0.0
        %381 = vmatprep.subr.mxu0 0.0
        %382 = vmatpush2.msra.mxu0 0.0
        %383 = vmatprep.subr.mxu0 0.0
        %384 = vmatpush2.msra.mxu0 0.0
        %385 = vmatprep.subr.mxu0 0.0
        %386 = vmatpush2.msra.mxu0 0.0
        %387 = vmatprep.subr.mxu0 0.0
        %388 = vmatpush2.msra.mxu0 0.0
        %389 = vmatprep.mubr.f32.mxu0 0.0
        %390 = vmatmul.mubr.f32.gmra.mxu0 %v323
        %v391 = vpop.f32.mrf.mxu0
        %v392 = vadd.f32 0.0, %v391
        %v393 = vpop.f32.mrf.mxu0
        %394 = vdwg.mxu0
        %vm395 = vcmp.eq.s32.totalorder %v315, %v316
        %v396 = vsel %vm395, 1, 0
        %v397 = vcvt.s32.f32 %v396
        %v399 = vsel %vm321, %v397, 0
        %401 = vmatprep.subr.mxu0 0.0
        %402 = vmatpush1.msra.mxu0 0.0
        %403 = vmatprep.subr.mxu0 0.0
        %404 = vmatpush1.msra.mxu0 0.0
        %405 = vmatprep.subr.mxu0 0.0
        %406 = vmatpush1.msra.mxu0 0.0
        %407 = vmatprep.subr.mxu0 0.0
        %408 = vmatpush1.msra.mxu0 0.0
        %409 = vmatprep.subr.mxu0 0.0
        %410 = vmatpush1.msra.mxu0 0.0
        %411 = vmatprep.subr.mxu0 0.0
        %412 = vmatpush1.msra.mxu0 0.0
        %413 = vmatprep.subr.mxu0 0.0
        %414 = vmatpush1.msra.mxu0 0.0
        %415 = vmatprep.subr.mxu0 0.0
        %416 = vmatpush1.msra.mxu0 0.0
        %417 = vmatprep.subr.mxu0 0.0
        %418 = vmatpush1.msra.mxu0 0.0
        %419 = vmatprep.subr.mxu0 0.0
        %420 = vmatpush1.msra.mxu0 0.0
        %421 = vmatprep.subr.mxu0 0.0
        %422 = vmatpush1.msra.mxu0 0.0
        %423 = vmatprep.subr.mxu0 0.0
        %424 = vmatpush1.msra.mxu0 0.0
        %425 = vmatprep.subr.mxu0 0.0
        %426 = vmatpush1.msra.mxu0 0.0
        %427 = vmatprep.subr.mxu0 0.0
        %428 = vmatpush1.msra.mxu0 0.0
        %429 = vmatprep.subr.mxu0 0.0
        %430 = vmatpush1.msra.mxu0 %v295
        %431 = vmatprep.subr.mxu0 0.0
        %432 = vmatpush1.msra.mxu0 %v294
        %433 = vmatprep.subr.mxu0 0.0
        %434 = vmatpush2.msra.mxu0 0.0
        %435 = vmatprep.subr.mxu0 0.0
        %436 = vmatpush2.msra.mxu0 0.0
        %437 = vmatprep.subr.mxu0 0.0
        %438 = vmatpush2.msra.mxu0 0.0
        %439 = vmatprep.subr.mxu0 0.0
        %440 = vmatpush2.msra.mxu0 0.0
        %441 = vmatprep.subr.mxu0 0.0
        %442 = vmatpush2.msra.mxu0 0.0
        %443 = vmatprep.subr.mxu0 0.0
        %444 = vmatpush2.msra.mxu0 0.0
        %445 = vmatprep.subr.mxu0 0.0
        %446 = vmatpush2.msra.mxu0 0.0
        %447 = vmatprep.subr.mxu0 0.0
        %448 = vmatpush2.msra.mxu0 0.0
        %449 = vmatprep.subr.mxu0 0.0
        %450 = vmatpush2.msra.mxu0 0.0
        %451 = vmatprep.subr.mxu0 0.0
        %452 = vmatpush2.msra.mxu0 0.0
        %453 = vmatprep.subr.mxu0 0.0
        %454 = vmatpush2.msra.mxu0 0.0
        %455 = vmatprep.subr.mxu0 0.0
        %456 = vmatpush2.msra.mxu0 0.0
        %457 = vmatprep.subr.mxu0 0.0
        %458 = vmatpush2.msra.mxu0 0.0
        %459 = vmatprep.subr.mxu0 0.0
        %460 = vmatpush2.msra.mxu0 0.0
        %461 = vmatprep.subr.mxu0 0.0
        %462 = vmatpush2.msra.mxu0 0.0
        %463 = vmatprep.subr.mxu0 0.0
        %464 = vmatpush2.msra.mxu0 0.0
        %465 = vmatprep.mubr.f32.mxu0 0.0
        %466 = vmatmul.mubr.f32.gmra.mxu0 %v399
        %v467 = vpop.f32.mrf.mxu0
        %v468 = vadd.f32 0.0, %v467
        %v469 = vpop.f32.mrf.mxu0
        %470 = vdwg.mxu0
        %v471 = vadd.s32 %v316, 1
        %vm472 = vcmp.eq.s32.totalorder %v315, %v471
        %v473 = vsel %vm472, 1, 0
        %v474 = vcvt.s32.f32 %v473
        %v476 = vsel %vm321, %v474, 0
        %478 = vmatprep.subr.mxu0 0.0
        %479 = vmatpush1.msra.mxu0 0.0
        %480 = vmatprep.subr.mxu0 0.0
        %481 = vmatpush1.msra.mxu0 0.0
        %482 = vmatprep.subr.mxu0 0.0
        %483 = vmatpush1.msra.mxu0 0.0
        %484 = vmatprep.subr.mxu0 0.0
        %485 = vmatpush1.msra.mxu0 0.0
        %486 = vmatprep.subr.mxu0 0.0
        %487 = vmatpush1.msra.mxu0 0.0
        %488 = vmatprep.subr.mxu0 0.0
        %489 = vmatpush1.msra.mxu0 0.0
        %490 = vmatprep.subr.mxu0 0.0
        %491 = vmatpush1.msra.mxu0 0.0
        %492 = vmatprep.subr.mxu0 0.0
        %493 = vmatpush1.msra.mxu0 0.0
        %494 = vmatprep.subr.mxu0 0.0
        %495 = vmatpush1.msra.mxu0 0.0
        %496 = vmatprep.subr.mxu0 0.0
        %497 = vmatpush1.msra.mxu0 0.0
        %498 = vmatprep.subr.mxu0 0.0
        %499 = vmatpush1.msra.mxu0 0.0
        %500 = vmatprep.subr.mxu0 0.0
        %501 = vmatpush1.msra.mxu0 0.0
        %502 = vmatprep.subr.mxu0 0.0
        %503 = vmatpush1.msra.mxu0 0.0
        %504 = vmatprep.subr.mxu0 0.0
        %505 = vmatpush1.msra.mxu0 0.0
        %506 = vmatprep.subr.mxu0 0.0
        %507 = vmatpush1.msra.mxu0 %v295
        %508 = vmatprep.subr.mxu0 0.0
        %509 = vmatpush1.msra.mxu0 %v294
        %510 = vmatprep.subr.mxu0 0.0
        %511 = vmatpush2.msra.mxu0 0.0
        %512 = vmatprep.subr.mxu0 0.0
        %513 = vmatpush2.msra.mxu0 0.0
        %514 = vmatprep.subr.mxu0 0.0
        %515 = vmatpush2.msra.mxu0 0.0
        %516 = vmatprep.subr.mxu0 0.0
        %517 = vmatpush2.msra.mxu0 0.0
        %518 = vmatprep.subr.mxu0 0.0
        %519 = vmatpush2.msra.mxu0 0.0
        %520 = vmatprep.subr.mxu0 0.0
        %521 = vmatpush2.msra.mxu0 0.0
        %522 = vmatprep.subr.mxu0 0.0
        %523 = vmatpush2.msra.mxu0 0.0
        %524 = vmatprep.subr.mxu0 0.0
        %525 = vmatpush2.msra.mxu0 0.0
        %526 = vmatprep.subr.mxu0 0.0
        %527 = vmatpush2.msra.mxu0 0.0
        %528 = vmatprep.subr.mxu0 0.0
        %529 = vmatpush2.msra.mxu0 0.0
        %530 = vmatprep.subr.mxu0 0.0
        %531 = vmatpush2.msra.mxu0 0.0
        %532 = vmatprep.subr.mxu0 0.0
        %533 = vmatpush2.msra.mxu0 0.0
        %534 = vmatprep.subr.mxu0 0.0
        %535 = vmatpush2.msra.mxu0 0.0
        %536 = vmatprep.subr.mxu0 0.0
        %537 = vmatpush2.msra.mxu0 0.0
        %538 = vmatprep.subr.mxu0 0.0
        %539 = vmatpush2.msra.mxu0 0.0
        %540 = vmatprep.subr.mxu0 0.0
        %541 = vmatpush2.msra.mxu0 0.0
        %542 = vmatprep.mubr.f32.mxu0 0.0
        %543 = vmatmul.mubr.f32.gmra.mxu0 %v476
        %v544 = vpop.f32.mrf.mxu0
        %v545 = vadd.f32 0.0, %v544
        %v546 = vpop.f32.mrf.mxu0
        %547 = vdwg.mxu0
        %v548 = vadd.s32 %v316, 2
        %vm549 = vcmp.eq.s32.totalorder %v315, %v548
        %v550 = vsel %vm549, 1, 0
        %v551 = vcvt.s32.f32 %v550
        %v553 = vsel %vm321, %v551, 0
        %555 = vmatprep.subr.mxu0 0.0
        %556 = vmatpush1.msra.mxu0 0.0
        %557 = vmatprep.subr.mxu0 0.0
        %558 = vmatpush1.msra.mxu0 0.0
        %559 = vmatprep.subr.mxu0 0.0
        %560 = vmatpush1.msra.mxu0 0.0
        %561 = vmatprep.subr.mxu0 0.0
        %562 = vmatpush1.msra.mxu0 0.0
        %563 = vmatprep.subr.mxu0 0.0
        %564 = vmatpush1.msra.mxu0 0.0
        %565 = vmatprep.subr.mxu0 0.0
        %566 = vmatpush1.msra.mxu0 0.0
        %567 = vmatprep.subr.mxu0 0.0
        %568 = vmatpush1.msra.mxu0 0.0
        %569 = vmatprep.subr.mxu0 0.0
        %570 = vmatpush1.msra.mxu0 0.0
        %571 = vmatprep.subr.mxu0 0.0
        %572 = vmatpush1.msra.mxu0 0.0
        %573 = vmatprep.subr.mxu0 0.0
        %574 = vmatpush1.msra.mxu0 0.0
        %575 = vmatprep.subr.mxu0 0.0
        %576 = vmatpush1.msra.mxu0 0.0
        %577 = vmatprep.subr.mxu0 0.0
        %578 = vmatpush1.msra.mxu0 0.0
        %579 = vmatprep.subr.mxu0 0.0
        %580 = vmatpush1.msra.mxu0 0.0
        %581 = vmatprep.subr.mxu0 0.0
        %582 = vmatpush1.msra.mxu0 0.0
        %583 = vmatprep.subr.mxu0 0.0
        %584 = vmatpush1.msra.mxu0 %v295
        %585 = vmatprep.subr.mxu0 0.0
        %586 = vmatpush1.msra.mxu0 %v294
        %587 = vmatprep.subr.mxu0 0.0
        %588 = vmatpush2.msra.mxu0 0.0
        %589 = vmatprep.subr.mxu0 0.0
        %590 = vmatpush2.msra.mxu0 0.0
        %591 = vmatprep.subr.mxu0 0.0
        %592 = vmatpush2.msra.mxu0 0.0
        %593 = vmatprep.subr.mxu0 0.0
        %594 = vmatpush2.msra.mxu0 0.0
        %595 = vmatprep.subr.mxu0 0.0
        %596 = vmatpush2.msra.mxu0 0.0
        %597 = vmatprep.subr.mxu0 0.0
        %598 = vmatpush2.msra.mxu0 0.0
        %599 = vmatprep.subr.mxu0 0.0
        %600 = vmatpush2.msra.mxu0 0.0
        %601 = vmatprep.subr.mxu0 0.0
        %602 = vmatpush2.msra.mxu0 0.0
        %603 = vmatprep.subr.mxu0 0.0
        %604 = vmatpush2.msra.mxu0 0.0
        %605 = vmatprep.subr.mxu0 0.0
        %606 = vmatpush2.msra.mxu0 0.0
        %607 = vmatprep.subr.mxu0 0.0
        %608 = vmatpush2.msra.mxu0 0.0
        %609 = vmatprep.subr.mxu0 0.0
        %610 = vmatpush2.msra.mxu0 0.0
        %611 = vmatprep.subr.mxu0 0.0
        %612 = vmatpush2.msra.mxu0 0.0
        %613 = vmatprep.subr.mxu0 0.0
        %614 = vmatpush2.msra.mxu0 0.0
        %615 = vmatprep.subr.mxu0 0.0
        %616 = vmatpush2.msra.mxu0 0.0
        %617 = vmatprep.subr.mxu0 0.0
        %618 = vmatpush2.msra.mxu0 0.0
        %619 = vmatprep.mubr.f32.mxu0 0.0
        %620 = vmatmul.mubr.f32.gmra.mxu0 %v553
        %v621 = vpop.f32.mrf.mxu0
        %v622 = vadd.f32 0.0, %v621
        %v623 = vpop.f32.mrf.mxu0
        %624 = vdwg.mxu0
        %626 = vrot.lane.b32.xlu0 %v468, 32
        %v627 = vpop.permute.xlu0 %626
        %630 = vrot.lane.b32.xlu0 %v545, 64
        %v631 = vpop.permute.xlu0 %630
        %634 = vrot.lane.b32.xlu0 %v622, 96
        %v635 = vpop.permute.xlu0 %634
        %vm637 = vcmask 261120
        %v638 = vsel %vm637, %v392, %v627
        %vm639 = vcmask 523264
        %v640 = vsel %vm639, %v638, %v631
        %vm641 = vcmask 785408
        %v642 = vsel %vm641, %v640, %v635
        %v643 = vlaneseq
        %v644 = vshrl.u32 %v643, 7
        %v645 = vsub.s32 1, %v644
        %v646 = vrot.slane %v196, %v645
        %647 = vmatprep.subr.mxu0 0.0
        %648 = vmatpush1.msra.mxu0 %v311
        %649 = vmatprep.subr.mxu0 0.0
        %650 = vmatpush1.msra.mxu0 %v310
        %651 = vmatprep.subr.mxu0 0.0
        %652 = vmatpush1.msra.mxu0 %v309
        %653 = vmatprep.subr.mxu0 0.0
        %654 = vmatpush1.msra.mxu0 %v308
        %655 = vmatprep.subr.mxu0 0.0
        %656 = vmatpush1.msra.mxu0 %v307
        %657 = vmatprep.subr.mxu0 0.0
        %658 = vmatpush1.msra.mxu0 %v306
        %659 = vmatprep.subr.mxu0 0.0
        %660 = vmatpush1.msra.mxu0 %v305
        %661 = vmatprep.subr.mxu0 0.0
        %662 = vmatpush1.msra.mxu0 %v304
        %663 = vmatprep.subr.mxu0 0.0
        %664 = vmatpush1.msra.mxu0 %v303
        %665 = vmatprep.subr.mxu0 0.0
        %666 = vmatpush1.msra.mxu0 %v302
        %667 = vmatprep.subr.mxu0 0.0
        %668 = vmatpush1.msra.mxu0 %v301
        %669 = vmatprep.subr.mxu0 0.0
        %670 = vmatpush1.msra.mxu0 %v300
        %671 = vmatprep.subr.mxu0 0.0
        %672 = vmatpush1.msra.mxu0 %v299
        %673 = vmatprep.subr.mxu0 0.0
        %674 = vmatpush1.msra.mxu0 %v298
        %675 = vmatprep.subr.mxu0 0.0
        %676 = vmatpush1.msra.mxu0 %v297
        %677 = vmatprep.subr.mxu0 0.0
        %678 = vmatpush1.msra.mxu0 %v296
        %679 = vmatprep.subr.mxu0 0.0
        %680 = vmatpush2.msra.mxu0 0.0
        %681 = vmatprep.subr.mxu0 0.0
        %682 = vmatpush2.msra.mxu0 0.0
        %683 = vmatprep.subr.mxu0 0.0
        %684 = vmatpush2.msra.mxu0 0.0
        %685 = vmatprep.subr.mxu0 0.0
        %686 = vmatpush2.msra.mxu0 0.0
        %687 = vmatprep.subr.mxu0 0.0
        %688 = vmatpush2.msra.mxu0 0.0
        %689 = vmatprep.subr.mxu0 0.0
        %690 = vmatpush2.msra.mxu0 0.0
        %691 = vmatprep.subr.mxu0 0.0
        %692 = vmatpush2.msra.mxu0 0.0
        %693 = vmatprep.subr.mxu0 0.0
        %694 = vmatpush2.msra.mxu0 0.0
        %695 = vmatprep.subr.mxu0 0.0
        %696 = vmatpush2.msra.mxu0 0.0
        %697 = vmatprep.subr.mxu0 0.0
        %698 = vmatpush2.msra.mxu0 0.0
        %699 = vmatprep.subr.mxu0 0.0
        %700 = vmatpush2.msra.mxu0 0.0
        %701 = vmatprep.subr.mxu0 0.0
        %702 = vmatpush2.msra.mxu0 0.0
        %703 = vmatprep.subr.mxu0 0.0
        %704 = vmatpush2.msra.mxu0 0.0
        %705 = vmatprep.subr.mxu0 0.0
        %706 = vmatpush2.msra.mxu0 0.0
        %707 = vmatprep.subr.mxu0 0.0
        %708 = vmatpush2.msra.mxu0 0.0
        %709 = vmatprep.subr.mxu0 0.0
        %710 = vmatpush2.msra.mxu0 0.0
        %711 = vmatprep.mubr.f32.mxu0 0.0
        %712 = vmatmul.mubr.f32.gmra.mxu0 %v642
        %v713 = vpop.f32.mrf.mxu0
        %v714 = vadd.f32 %v646, %v713
        %v715 = vpop.f32.mrf.mxu0
        %716 = vdwg.mxu0
        %vm717 = vcmp.gt.f32.partialorder %v714, 0.0
        %v718 = vmul.f32 %v714, 0.2
        %v719 = vsel %vm717, %v714, %v718
        %s720 = scalar_lea.vmem %s2, 128
        %v721 = vld [vmem:[%s720] sm:$0xff]
        %v722 = vld [vmem:[%s720 + $0x8] sm:$0xff]
        %v723 = vld [vmem:[%s720 + $0x10] sm:$0xff]
        %v724 = vld [vmem:[%s720 + $0x18] sm:$0xff]
        %v725 = vld [vmem:[%s720 + $0x20] sm:$0xff]
        %v726 = vld [vmem:[%s720 + $0x28] sm:$0xff]
        %v727 = vld [vmem:[%s720 + $0x30] sm:$0xff]
        %v728 = vld [vmem:[%s720 + $0x38] sm:$0xff]
        %v729 = vld [vmem:[%s720 + $0x40] sm:$0xff]
        %v730 = vld [vmem:[%s720 + $0x48] sm:$0xff]
        %v731 = vld [vmem:[%s720 + $0x50] sm:$0xff]
        %v732 = vld [vmem:[%s720 + $0x58] sm:$0xff]
        %v733 = vld [vmem:[%s720 + $0x60] sm:$0xff]
        %v734 = vld [vmem:[%s720 + $0x68] sm:$0xff]
        %v735 = vld [vmem:[%s720 + $0x70] sm:$0xff]
        %v736 = vld [vmem:[%s720 + $0x78] sm:$0xff]
        %vm737 = vcmask 64512
        %v738 = vsel %vm737, %v320, 0
        %740 = vmatprep.subr.mxu0 0.0
        %741 = vmatpush1.msra.mxu0 0.0
        %742 = vmatprep.subr.mxu0 0.0
        %743 = vmatpush1.msra.mxu0 0.0
        %744 = vmatprep.subr.mxu0 0.0
        %745 = vmatpush1.msra.mxu0 0.0
        %746 = vmatprep.subr.mxu0 0.0
        %747 = vmatpush1.msra.mxu0 0.0
        %748 = vmatprep.subr.mxu0 0.0
        %749 = vmatpush1.msra.mxu0 0.0
        %750 = vmatprep.subr.mxu0 0.0
        %751 = vmatpush1.msra.mxu0 0.0
        %752 = vmatprep.subr.mxu0 0.0
        %753 = vmatpush1.msra.mxu0 0.0
        %754 = vmatprep.subr.mxu0 0.0
        %755 = vmatpush1.msra.mxu0 0.0
        %756 = vmatprep.subr.mxu0 0.0
        %757 = vmatpush1.msra.mxu0 0.0
        %758 = vmatprep.subr.mxu0 0.0
        %759 = vmatpush1.msra.mxu0 0.0
        %760 = vmatprep.subr.mxu0 0.0
        %761 = vmatpush1.msra.mxu0 0.0
        %762 = vmatprep.subr.mxu0 0.0
        %763 = vmatpush1.msra.mxu0 0.0
        %764 = vmatprep.subr.mxu0 0.0
        %765 = vmatpush1.msra.mxu0 0.0
        %766 = vmatprep.subr.mxu0 0.0
        %767 = vmatpush1.msra.mxu0 0.0
        %768 = vmatprep.subr.mxu0 0.0
        %769 = vmatpush1.msra.mxu0 0.0
        %770 = vmatprep.subr.mxu0 0.0
        %771 = vmatpush1.msra.mxu0 %v719
        %772 = vmatprep.subr.mxu0 0.0
        %773 = vmatpush2.msra.mxu0 0.0
        %774 = vmatprep.subr.mxu0 0.0
        %775 = vmatpush2.msra.mxu0 0.0
        %776 = vmatprep.subr.mxu0 0.0
        %777 = vmatpush2.msra.mxu0 0.0
        %778 = vmatprep.subr.mxu0 0.0
        %779 = vmatpush2.msra.mxu0 0.0
        %780 = vmatprep.subr.mxu0 0.0
        %781 = vmatpush2.msra.mxu0 0.0
        %782 = vmatprep.subr.mxu0 0.0
        %783 = vmatpush2.msra.mxu0 0.0
        %784 = vmatprep.subr.mxu0 0.0
        %785 = vmatpush2.msra.mxu0 0.0
        %786 = vmatprep.subr.mxu0 0.0
        %787 = vmatpush2.msra.mxu0 0.0
        %788 = vmatprep.subr.mxu0 0.0
        %789 = vmatpush2.msra.mxu0 0.0
        %790 = vmatprep.subr.mxu0 0.0
        %791 = vmatpush2.msra.mxu0 0.0
        %792 = vmatprep.subr.mxu0 0.0
        %793 = vmatpush2.msra.mxu0 0.0
        %794 = vmatprep.subr.mxu0 0.0
        %795 = vmatpush2.msra.mxu0 0.0
        %796 = vmatprep.subr.mxu0 0.0
        %797 = vmatpush2.msra.mxu0 0.0
        %798 = vmatprep.subr.mxu0 0.0
        %799 = vmatpush2.msra.mxu0 0.0
        %800 = vmatprep.subr.mxu0 0.0
        %801 = vmatpush2.msra.mxu0 0.0
        %802 = vmatprep.subr.mxu0 0.0
        %803 = vmatpush2.msra.mxu0 0.0
        %804 = vmatprep.mubr.f32.mxu0 0.0
        %805 = vmatmul.mubr.f32.gmra.mxu0 %v738
        %v806 = vpop.f32.mrf.mxu0
        %v807 = vadd.f32 0.0, %v806
        %v808 = vpop.f32.mrf.mxu0
        %809 = vdwg.mxu0
        %v810 = vsel %vm737, %v397, 0
        %812 = vmatprep.subr.mxu0 0.0
        %813 = vmatpush1.msra.mxu0 0.0
        %814 = vmatprep.subr.mxu0 0.0
        %815 = vmatpush1.msra.mxu0 0.0
        %816 = vmatprep.subr.mxu0 0.0
        %817 = vmatpush1.msra.mxu0 0.0
        %818 = vmatprep.subr.mxu0 0.0
        %819 = vmatpush1.msra.mxu0 0.0
        %820 = vmatprep.subr.mxu0 0.0
        %821 = vmatpush1.msra.mxu0 0.0
        %822 = vmatprep.subr.mxu0 0.0
        %823 = vmatpush1.msra.mxu0 0.0
        %824 = vmatprep.subr.mxu0 0.0
        %825 = vmatpush1.msra.mxu0 0.0
        %826 = vmatprep.subr.mxu0 0.0
        %827 = vmatpush1.msra.mxu0 0.0
        %828 = vmatprep.subr.mxu0 0.0
        %829 = vmatpush1.msra.mxu0 0.0
        %830 = vmatprep.subr.mxu0 0.0
        %831 = vmatpush1.msra.mxu0 0.0
        %832 = vmatprep.subr.mxu0 0.0
        %833 = vmatpush1.msra.mxu0 0.0
        %834 = vmatprep.subr.mxu0 0.0
        %835 = vmatpush1.msra.mxu0 0.0
        %836 = vmatprep.subr.mxu0 0.0
        %837 = vmatpush1.msra.mxu0 0.0
        %838 = vmatprep.subr.mxu0 0.0
        %839 = vmatpush1.msra.mxu0 0.0
        %840 = vmatprep.subr.mxu0 0.0
        %841 = vmatpush1.msra.mxu0 0.0
        %842 = vmatprep.subr.mxu0 0.0
        %843 = vmatpush1.msra.mxu0 %v719
        %844 = vmatprep.subr.mxu0 0.0
        %845 = vmatpush2.msra.mxu0 0.0
        %846 = vmatprep.subr.mxu0 0.0
        %847 = vmatpush2.msra.mxu0 0.0
        %848 = vmatprep.subr.mxu0 0.0
        %849 = vmatpush2.msra.mxu0 0.0
        %850 = vmatprep.subr.mxu0 0.0
        %851 = vmatpush2.msra.mxu0 0.0
        %852 = vmatprep.subr.mxu0 0.0
        %853 = vmatpush2.msra.mxu0 0.0
        %854 = vmatprep.subr.mxu0 0.0
        %855 = vmatpush2.msra.mxu0 0.0
        %856 = vmatprep.subr.mxu0 0.0
        %857 = vmatpush2.msra.mxu0 0.0
        %858 = vmatprep.subr.mxu0 0.0
        %859 = vmatpush2.msra.mxu0 0.0
        %860 = vmatprep.subr.mxu0 0.0
        %861 = vmatpush2.msra.mxu0 0.0
        %862 = vmatprep.subr.mxu0 0.0
        %863 = vmatpush2.msra.mxu0 0.0
        %864 = vmatprep.subr.mxu0 0.0
        %865 = vmatpush2.msra.mxu0 0.0
        %866 = vmatprep.subr.mxu0 0.0
        %867 = vmatpush2.msra.mxu0 0.0
        %868 = vmatprep.subr.mxu0 0.0
        %869 = vmatpush2.msra.mxu0 0.0
        %870 = vmatprep.subr.mxu0 0.0
        %871 = vmatpush2.msra.mxu0 0.0
        %872 = vmatprep.subr.mxu0 0.0
        %873 = vmatpush2.msra.mxu0 0.0
        %874 = vmatprep.subr.mxu0 0.0
        %875 = vmatpush2.msra.mxu0 0.0
        %876 = vmatprep.mubr.f32.mxu0 0.0
        %877 = vmatmul.mubr.f32.gmra.mxu0 %v810
        %v878 = vpop.f32.mrf.mxu0
        %v879 = vadd.f32 0.0, %v878
        %v880 = vpop.f32.mrf.mxu0
        %881 = vdwg.mxu0
        %v882 = vsel %vm737, %v474, 0
        %884 = vmatprep.subr.mxu0 0.0
        %885 = vmatpush1.msra.mxu0 0.0
        %886 = vmatprep.subr.mxu0 0.0
        %887 = vmatpush1.msra.mxu0 0.0
        %888 = vmatprep.subr.mxu0 0.0
        %889 = vmatpush1.msra.mxu0 0.0
        %890 = vmatprep.subr.mxu0 0.0
        %891 = vmatpush1.msra.mxu0 0.0
        %892 = vmatprep.subr.mxu0 0.0
        %893 = vmatpush1.msra.mxu0 0.0
        %894 = vmatprep.subr.mxu0 0.0
        %895 = vmatpush1.msra.mxu0 0.0
        %896 = vmatprep.subr.mxu0 0.0
        %897 = vmatpush1.msra.mxu0 0.0
        %898 = vmatprep.subr.mxu0 0.0
        %899 = vmatpush1.msra.mxu0 0.0
        %900 = vmatprep.subr.mxu0 0.0
        %901 = vmatpush1.msra.mxu0 0.0
        %902 = vmatprep.subr.mxu0 0.0
        %903 = vmatpush1.msra.mxu0 0.0
        %904 = vmatprep.subr.mxu0 0.0
        %905 = vmatpush1.msra.mxu0 0.0
        %906 = vmatprep.subr.mxu0 0.0
        %907 = vmatpush1.msra.mxu0 0.0
        %908 = vmatprep.subr.mxu0 0.0
        %909 = vmatpush1.msra.mxu0 0.0
        %910 = vmatprep.subr.mxu0 0.0
        %911 = vmatpush1.msra.mxu0 0.0
        %912 = vmatprep.subr.mxu0 0.0
        %913 = vmatpush1.msra.mxu0 0.0
        %914 = vmatprep.subr.mxu0 0.0
        %915 = vmatpush1.msra.mxu0 %v719
        %916 = vmatprep.subr.mxu0 0.0
        %917 = vmatpush2.msra.mxu0 0.0
        %918 = vmatprep.subr.mxu0 0.0
        %919 = vmatpush2.msra.mxu0 0.0
        %920 = vmatprep.subr.mxu0 0.0
        %921 = vmatpush2.msra.mxu0 0.0
        %922 = vmatprep.subr.mxu0 0.0
        %923 = vmatpush2.msra.mxu0 0.0
        %924 = vmatprep.subr.mxu0 0.0
        %925 = vmatpush2.msra.mxu0 0.0
        %926 = vmatprep.subr.mxu0 0.0
        %927 = vmatpush2.msra.mxu0 0.0
        %928 = vmatprep.subr.mxu0 0.0
        %929 = vmatpush2.msra.mxu0 0.0
        %930 = vmatprep.subr.mxu0 0.0
        %931 = vmatpush2.msra.mxu0 0.0
        %932 = vmatprep.subr.mxu0 0.0
        %933 = vmatpush2.msra.mxu0 0.0
        %934 = vmatprep.subr.mxu0 0.0
        %935 = vmatpush2.msra.mxu0 0.0
        %936 = vmatprep.subr.mxu0 0.0
        %937 = vmatpush2.msra.mxu0 0.0
        %938 = vmatprep.subr.mxu0 0.0
        %939 = vmatpush2.msra.mxu0 0.0
        %940 = vmatprep.subr.mxu0 0.0
        %941 = vmatpush2.msra.mxu0 0.0
        %942 = vmatprep.subr.mxu0 0.0
        %943 = vmatpush2.msra.mxu0 0.0
        %944 = vmatprep.subr.mxu0 0.0
        %945 = vmatpush2.msra.mxu0 0.0
        %946 = vmatprep.subr.mxu0 0.0
        %947 = vmatpush2.msra.mxu0 0.0
        %948 = vmatprep.mubr.f32.mxu0 0.0
        %949 = vmatmul.mubr.f32.gmra.mxu0 %v882
        %v950 = vpop.f32.mrf.mxu0
        %v951 = vadd.f32 0.0, %v950
        %v952 = vpop.f32.mrf.mxu0
        %953 = vdwg.mxu0
        %v954 = vsel %vm737, %v551, 0
        %956 = vmatprep.subr.mxu0 0.0
        %957 = vmatpush1.msra.mxu0 0.0
        %958 = vmatprep.subr.mxu0 0.0
        %959 = vmatpush1.msra.mxu0 0.0
        %960 = vmatprep.subr.mxu0 0.0
        %961 = vmatpush1.msra.mxu0 0.0
        %962 = vmatprep.subr.mxu0 0.0
        %963 = vmatpush1.msra.mxu0 0.0
        %964 = vmatprep.subr.mxu0 0.0
        %965 = vmatpush1.msra.mxu0 0.0
        %966 = vmatprep.subr.mxu0 0.0
        %967 = vmatpush1.msra.mxu0 0.0
        %968 = vmatprep.subr.mxu0 0.0
        %969 = vmatpush1.msra.mxu0 0.0
        %970 = vmatprep.subr.mxu0 0.0
        %971 = vmatpush1.msra.mxu0 0.0
        %972 = vmatprep.subr.mxu0 0.0
        %973 = vmatpush1.msra.mxu0 0.0
        %974 = vmatprep.subr.mxu0 0.0
        %975 = vmatpush1.msra.mxu0 0.0
        %976 = vmatprep.subr.mxu0 0.0
        %977 = vmatpush1.msra.mxu0 0.0
        %978 = vmatprep.subr.mxu0 0.0
        %979 = vmatpush1.msra.mxu0 0.0
        %980 = vmatprep.subr.mxu0 0.0
        %981 = vmatpush1.msra.mxu0 0.0
        %982 = vmatprep.subr.mxu0 0.0
        %983 = vmatpush1.msra.mxu0 0.0
        %984 = vmatprep.subr.mxu0 0.0
        %985 = vmatpush1.msra.mxu0 0.0
        %986 = vmatprep.subr.mxu0 0.0
        %987 = vmatpush1.msra.mxu0 %v719
        %988 = vmatprep.subr.mxu0 0.0
        %989 = vmatpush2.msra.mxu0 0.0
        %990 = vmatprep.subr.mxu0 0.0
        %991 = vmatpush2.msra.mxu0 0.0
        %992 = vmatprep.subr.mxu0 0.0
        %993 = vmatpush2.msra.mxu0 0.0
        %994 = vmatprep.subr.mxu0 0.0
        %995 = vmatpush2.msra.mxu0 0.0
        %996 = vmatprep.subr.mxu0 0.0
        %997 = vmatpush2.msra.mxu0 0.0
        %998 = vmatprep.subr.mxu0 0.0
        %999 = vmatpush2.msra.mxu0 0.0
        %1000 = vmatprep.subr.mxu0 0.0
        %1001 = vmatpush2.msra.mxu0 0.0
        %1002 = vmatprep.subr.mxu0 0.0
        %1003 = vmatpush2.msra.mxu0 0.0
        %1004 = vmatprep.subr.mxu0 0.0
        %1005 = vmatpush2.msra.mxu0 0.0
        %1006 = vmatprep.subr.mxu0 0.0
        %1007 = vmatpush2.msra.mxu0 0.0
        %1008 = vmatprep.subr.mxu0 0.0
        %1009 = vmatpush2.msra.mxu0 0.0
        %1010 = vmatprep.subr.mxu0 0.0
        %1011 = vmatpush2.msra.mxu0 0.0
        %1012 = vmatprep.subr.mxu0 0.0
        %1013 = vmatpush2.msra.mxu0 0.0
        %1014 = vmatprep.subr.mxu0 0.0
        %1015 = vmatpush2.msra.mxu0 0.0
        %1016 = vmatprep.subr.mxu0 0.0
        %1017 = vmatpush2.msra.mxu0 0.0
        %1018 = vmatprep.subr.mxu0 0.0
        %1019 = vmatpush2.msra.mxu0 0.0
        %1020 = vmatprep.mubr.f32.mxu0 0.0
        %1021 = vmatmul.mubr.f32.gmra.mxu0 %v954
        %v1022 = vpop.f32.mrf.mxu0
        %v1023 = vadd.f32 0.0, %v1022
        %v1024 = vpop.f32.mrf.mxu0
        %1025 = vdwg.mxu0
        %1027 = vrot.lane.b32.xlu0 %v879, 32
        %v1028 = vpop.permute.xlu0 %1027
        %1031 = vrot.lane.b32.xlu0 %v951, 64
        %v1032 = vpop.permute.xlu0 %1031
        %1035 = vrot.lane.b32.xlu0 %v1023, 96
        %v1036 = vpop.permute.xlu0 %1035
        %v1038 = vsel %vm637, %v807, %v1028
        %v1039 = vsel %vm639, %v1038, %v1032
        %v1040 = vsel %vm641, %v1039, %v1036
        %v1041 = vlaneseq
        %v1042 = vshrl.u32 %v1041, 7
        %v1043 = vsub.s32 2, %v1042
        %v1044 = vrot.slane %v196, %v1043
        %1045 = vmatprep.subr.mxu0 0.0
        %1046 = vmatpush1.msra.mxu0 %v736
        %1047 = vmatprep.subr.mxu0 0.0
        %1048 = vmatpush1.msra.mxu0 %v735
        %1049 = vmatprep.subr.mxu0 0.0
        %1050 = vmatpush1.msra.mxu0 %v734
        %1051 = vmatprep.subr.mxu0 0.0
        %1052 = vmatpush1.msra.mxu0 %v733
        %1053 = vmatprep.subr.mxu0 0.0
        %1054 = vmatpush1.msra.mxu0 %v732
        %1055 = vmatprep.subr.mxu0 0.0
        %1056 = vmatpush1.msra.mxu0 %v731
        %1057 = vmatprep.subr.mxu0 0.0
        %1058 = vmatpush1.msra.mxu0 %v730
        %1059 = vmatprep.subr.mxu0 0.0
        %1060 = vmatpush1.msra.mxu0 %v729
        %1061 = vmatprep.subr.mxu0 0.0
        %1062 = vmatpush1.msra.mxu0 %v728
        %1063 = vmatprep.subr.mxu0 0.0
        %1064 = vmatpush1.msra.mxu0 %v727
        %1065 = vmatprep.subr.mxu0 0.0
        %1066 = vmatpush1.msra.mxu0 %v726
        %1067 = vmatprep.subr.mxu0 0.0
        %1068 = vmatpush1.msra.mxu0 %v725
        %1069 = vmatprep.subr.mxu0 0.0
        %1070 = vmatpush1.msra.mxu0 %v724
        %1071 = vmatprep.subr.mxu0 0.0
        %1072 = vmatpush1.msra.mxu0 %v723
        %1073 = vmatprep.subr.mxu0 0.0
        %1074 = vmatpush1.msra.mxu0 %v722
        %1075 = vmatprep.subr.mxu0 0.0
        %1076 = vmatpush1.msra.mxu0 %v721
        %1077 = vmatprep.subr.mxu0 0.0
        %1078 = vmatpush2.msra.mxu0 0.0
        %1079 = vmatprep.subr.mxu0 0.0
        %1080 = vmatpush2.msra.mxu0 0.0
        %1081 = vmatprep.subr.mxu0 0.0
        %1082 = vmatpush2.msra.mxu0 0.0
        %1083 = vmatprep.subr.mxu0 0.0
        %1084 = vmatpush2.msra.mxu0 0.0
        %1085 = vmatprep.subr.mxu0 0.0
        %1086 = vmatpush2.msra.mxu0 0.0
        %1087 = vmatprep.subr.mxu0 0.0
        %1088 = vmatpush2.msra.mxu0 0.0
        %1089 = vmatprep.subr.mxu0 0.0
        %1090 = vmatpush2.msra.mxu0 0.0
        %1091 = vmatprep.subr.mxu0 0.0
        %1092 = vmatpush2.msra.mxu0 0.0
        %1093 = vmatprep.subr.mxu0 0.0
        %1094 = vmatpush2.msra.mxu0 0.0
        %1095 = vmatprep.subr.mxu0 0.0
        %1096 = vmatpush2.msra.mxu0 0.0
        %1097 = vmatprep.subr.mxu0 0.0
        %1098 = vmatpush2.msra.mxu0 0.0
        %1099 = vmatprep.subr.mxu0 0.0
        %1100 = vmatpush2.msra.mxu0 0.0
        %1101 = vmatprep.subr.mxu0 0.0
        %1102 = vmatpush2.msra.mxu0 0.0
        %1103 = vmatprep.subr.mxu0 0.0
        %1104 = vmatpush2.msra.mxu0 0.0
        %1105 = vmatprep.subr.mxu0 0.0
        %1106 = vmatpush2.msra.mxu0 0.0
        %1107 = vmatprep.subr.mxu0 0.0
        %1108 = vmatpush2.msra.mxu0 0.0
        %1109 = vmatprep.mubr.f32.mxu0 0.0
        %1110 = vmatmul.mubr.f32.gmra.mxu0 %v1040
        %v1111 = vpop.f32.mrf.mxu0
        %v1112 = vadd.f32 %v1044, %v1111
        %v1113 = vpop.f32.mrf.mxu0
        %1114 = vdwg.mxu0
        %vm1115 = vcmp.gt.f32.partialorder %v1112, 0.0
        %v1116 = vmul.f32 %v1112, 0.2
        %v1117 = vsel %vm1115, %v1112, %v1116
        %s1118 = scalar_lea.vmem %s2, 256
        %v1119 = vld [vmem:[%s1118] sm:$0xff]
        %v1120 = vld [vmem:[%s1118 + $0x8] sm:$0xff]
        %v1121 = vld [vmem:[%s1118 + $0x10] sm:$0xff]
        %v1122 = vld [vmem:[%s1118 + $0x18] sm:$0xff]
        %v1123 = vld [vmem:[%s1118 + $0x20] sm:$0xff]
        %v1124 = vld [vmem:[%s1118 + $0x28] sm:$0xff]
        %v1125 = vld [vmem:[%s1118 + $0x30] sm:$0xff]
        %v1126 = vld [vmem:[%s1118 + $0x38] sm:$0xff]
        %v1127 = vld [vmem:[%s1118 + $0x40] sm:$0xff]
        %v1128 = vld [vmem:[%s1118 + $0x48] sm:$0xff]
        %v1129 = vld [vmem:[%s1118 + $0x50] sm:$0xff]
        %v1130 = vld [vmem:[%s1118 + $0x58] sm:$0xff]
        %v1131 = vld [vmem:[%s1118 + $0x60] sm:$0xff]
        %v1132 = vld [vmem:[%s1118 + $0x68] sm:$0xff]
        %v1133 = vld [vmem:[%s1118 + $0x70] sm:$0xff]
        %v1134 = vld [vmem:[%s1118 + $0x78] sm:$0xff]
        %vm1135 = vcmask 31744
        %v1136 = vsel %vm1135, %v320, 0
        %vm1138 = vcmask 1043456
        %v1140 = vsel %vm1138, %v1117, 0
        %1142 = vmatprep.subr.mxu0 0.0
        %1143 = vmatpush1.msra.mxu0 0.0
        %1144 = vmatprep.subr.mxu0 0.0
        %1145 = vmatpush1.msra.mxu0 0.0
        %1146 = vmatprep.subr.mxu0 0.0
        %1147 = vmatpush1.msra.mxu0 0.0
        %1148 = vmatprep.subr.mxu0 0.0
        %1149 = vmatpush1.msra.mxu0 0.0
        %1150 = vmatprep.subr.mxu0 0.0
        %1151 = vmatpush1.msra.mxu0 0.0
        %1152 = vmatprep.subr.mxu0 0.0
        %1153 = vmatpush1.msra.mxu0 0.0
        %1154 = vmatprep.subr.mxu0 0.0
        %1155 = vmatpush1.msra.mxu0 0.0
        %1156 = vmatprep.subr.mxu0 0.0
        %1157 = vmatpush1.msra.mxu0 0.0
        %1158 = vmatprep.subr.mxu0 0.0
        %1159 = vmatpush1.msra.mxu0 0.0
        %1160 = vmatprep.subr.mxu0 0.0
        %1161 = vmatpush1.msra.mxu0 0.0
        %1162 = vmatprep.subr.mxu0 0.0
        %1163 = vmatpush1.msra.mxu0 0.0
        %1164 = vmatprep.subr.mxu0 0.0
        %1165 = vmatpush1.msra.mxu0 0.0
        %1166 = vmatprep.subr.mxu0 0.0
        %1167 = vmatpush1.msra.mxu0 0.0
        %1168 = vmatprep.subr.mxu0 0.0
        %1169 = vmatpush1.msra.mxu0 0.0
        %1170 = vmatprep.subr.mxu0 0.0
        %1171 = vmatpush1.msra.mxu0 0.0
        %1172 = vmatprep.subr.mxu0 0.0
        %1173 = vmatpush1.msra.mxu0 %v1140
        %1174 = vmatprep.subr.mxu0 0.0
        %1175 = vmatpush2.msra.mxu0 0.0
        %1176 = vmatprep.subr.mxu0 0.0
        %1177 = vmatpush2.msra.mxu0 0.0
        %1178 = vmatprep.subr.mxu0 0.0
        %1179 = vmatpush2.msra.mxu0 0.0
        %1180 = vmatprep.subr.mxu0 0.0
        %1181 = vmatpush2.msra.mxu0 0.0
        %1182 = vmatprep.subr.mxu0 0.0
        %1183 = vmatpush2.msra.mxu0 0.0
        %1184 = vmatprep.subr.mxu0 0.0
        %1185 = vmatpush2.msra.mxu0 0.0
        %1186 = vmatprep.subr.mxu0 0.0
        %1187 = vmatpush2.msra.mxu0 0.0
        %1188 = vmatprep.subr.mxu0 0.0
        %1189 = vmatpush2.msra.mxu0 0.0
        %1190 = vmatprep.subr.mxu0 0.0
        %1191 = vmatpush2.msra.mxu0 0.0
        %1192 = vmatprep.subr.mxu0 0.0
        %1193 = vmatpush2.msra.mxu0 0.0
        %1194 = vmatprep.subr.mxu0 0.0
        %1195 = vmatpush2.msra.mxu0 0.0
        %1196 = vmatprep.subr.mxu0 0.0
        %1197 = vmatpush2.msra.mxu0 0.0
        %1198 = vmatprep.subr.mxu0 0.0
        %1199 = vmatpush2.msra.mxu0 0.0
        %1200 = vmatprep.subr.mxu0 0.0
        %1201 = vmatpush2.msra.mxu0 0.0
        %1202 = vmatprep.subr.mxu0 0.0
        %1203 = vmatpush2.msra.mxu0 0.0
        %1204 = vmatprep.subr.mxu0 0.0
        %1205 = vmatpush2.msra.mxu0 0.0
        %1206 = vmatprep.mubr.f32.mxu0 0.0
        %1207 = vmatmul.mubr.f32.gmra.mxu0 %v1136
        %v1208 = vpop.f32.mrf.mxu0
        %v1209 = vadd.f32 0.0, %v1208
        %v1210 = vpop.f32.mrf.mxu0
        %1211 = vdwg.mxu0
        %v1212 = vsel %vm1135, %v397, 0
        %1214 = vmatprep.subr.mxu0 0.0
        %1215 = vmatpush1.msra.mxu0 0.0
        %1216 = vmatprep.subr.mxu0 0.0
        %1217 = vmatpush1.msra.mxu0 0.0
        %1218 = vmatprep.subr.mxu0 0.0
        %1219 = vmatpush1.msra.mxu0 0.0
        %1220 = vmatprep.subr.mxu0 0.0
        %1221 = vmatpush1.msra.mxu0 0.0
        %1222 = vmatprep.subr.mxu0 0.0
        %1223 = vmatpush1.msra.mxu0 0.0
        %1224 = vmatprep.subr.mxu0 0.0
        %1225 = vmatpush1.msra.mxu0 0.0
        %1226 = vmatprep.subr.mxu0 0.0
        %1227 = vmatpush1.msra.mxu0 0.0
        %1228 = vmatprep.subr.mxu0 0.0
        %1229 = vmatpush1.msra.mxu0 0.0
        %1230 = vmatprep.subr.mxu0 0.0
        %1231 = vmatpush1.msra.mxu0 0.0
        %1232 = vmatprep.subr.mxu0 0.0
        %1233 = vmatpush1.msra.mxu0 0.0
        %1234 = vmatprep.subr.mxu0 0.0
        %1235 = vmatpush1.msra.mxu0 0.0
        %1236 = vmatprep.subr.mxu0 0.0
        %1237 = vmatpush1.msra.mxu0 0.0
        %1238 = vmatprep.subr.mxu0 0.0
        %1239 = vmatpush1.msra.mxu0 0.0
        %1240 = vmatprep.subr.mxu0 0.0
        %1241 = vmatpush1.msra.mxu0 0.0
        %1242 = vmatprep.subr.mxu0 0.0
        %1243 = vmatpush1.msra.mxu0 0.0
        %1244 = vmatprep.subr.mxu0 0.0
        %1245 = vmatpush1.msra.mxu0 %v1140
        %1246 = vmatprep.subr.mxu0 0.0
        %1247 = vmatpush2.msra.mxu0 0.0
        %1248 = vmatprep.subr.mxu0 0.0
        %1249 = vmatpush2.msra.mxu0 0.0
        %1250 = vmatprep.subr.mxu0 0.0
        %1251 = vmatpush2.msra.mxu0 0.0
        %1252 = vmatprep.subr.mxu0 0.0
        %1253 = vmatpush2.msra.mxu0 0.0
        %1254 = vmatprep.subr.mxu0 0.0
        %1255 = vmatpush2.msra.mxu0 0.0
        %1256 = vmatprep.subr.mxu0 0.0
        %1257 = vmatpush2.msra.mxu0 0.0
        %1258 = vmatprep.subr.mxu0 0.0
        %1259 = vmatpush2.msra.mxu0 0.0
        %1260 = vmatprep.subr.mxu0 0.0
        %1261 = vmatpush2.msra.mxu0 0.0
        %1262 = vmatprep.subr.mxu0 0.0
        %1263 = vmatpush2.msra.mxu0 0.0
        %1264 = vmatprep.subr.mxu0 0.0
        %1265 = vmatpush2.msra.mxu0 0.0
        %1266 = vmatprep.subr.mxu0 0.0
        %1267 = vmatpush2.msra.mxu0 0.0
        %1268 = vmatprep.subr.mxu0 0.0
        %1269 = vmatpush2.msra.mxu0 0.0
        %1270 = vmatprep.subr.mxu0 0.0
        %1271 = vmatpush2.msra.mxu0 0.0
        %1272 = vmatprep.subr.mxu0 0.0
        %1273 = vmatpush2.msra.mxu0 0.0
        %1274 = vmatprep.subr.mxu0 0.0
        %1275 = vmatpush2.msra.mxu0 0.0
        %1276 = vmatprep.subr.mxu0 0.0
        %1277 = vmatpush2.msra.mxu0 0.0
        %1278 = vmatprep.mubr.f32.mxu0 0.0
        %1279 = vmatmul.mubr.f32.gmra.mxu0 %v1212
        %v1280 = vpop.f32.mrf.mxu0
        %v1281 = vadd.f32 0.0, %v1280
        %v1282 = vpop.f32.mrf.mxu0
        %1283 = vdwg.mxu0
        %v1284 = vsel %vm1135, %v474, 0
        %1286 = vmatprep.subr.mxu0 0.0
        %1287 = vmatpush1.msra.mxu0 0.0
        %1288 = vmatprep.subr.mxu0 0.0
        %1289 = vmatpush1.msra.mxu0 0.0
        %1290 = vmatprep.subr.mxu0 0.0
        %1291 = vmatpush1.msra.mxu0 0.0
        %1292 = vmatprep.subr.mxu0 0.0
        %1293 = vmatpush1.msra.mxu0 0.0
        %1294 = vmatprep.subr.mxu0 0.0
        %1295 = vmatpush1.msra.mxu0 0.0
        %1296 = vmatprep.subr.mxu0 0.0
        %1297 = vmatpush1.msra.mxu0 0.0
        %1298 = vmatprep.subr.mxu0 0.0
        %1299 = vmatpush1.msra.mxu0 0.0
        %1300 = vmatprep.subr.mxu0 0.0
        %1301 = vmatpush1.msra.mxu0 0.0
        %1302 = vmatprep.subr.mxu0 0.0
        %1303 = vmatpush1.msra.mxu0 0.0
        %1304 = vmatprep.subr.mxu0 0.0
        %1305 = vmatpush1.msra.mxu0 0.0
        %1306 = vmatprep.subr.mxu0 0.0
        %1307 = vmatpush1.msra.mxu0 0.0
        %1308 = vmatprep.subr.mxu0 0.0
        %1309 = vmatpush1.msra.mxu0 0.0
        %1310 = vmatprep.subr.mxu0 0.0
        %1311 = vmatpush1.msra.mxu0 0.0
        %1312 = vmatprep.subr.mxu0 0.0
        %1313 = vmatpush1.msra.mxu0 0.0
        %1314 = vmatprep.subr.mxu0 0.0
        %1315 = vmatpush1.msra.mxu0 0.0
        %1316 = vmatprep.subr.mxu0 0.0
        %1317 = vmatpush1.msra.mxu0 %v1140
        %1318 = vmatprep.subr.mxu0 0.0
        %1319 = vmatpush2.msra.mxu0 0.0
        %1320 = vmatprep.subr.mxu0 0.0
        %1321 = vmatpush2.msra.mxu0 0.0
        %1322 = vmatprep.subr.mxu0 0.0
        %1323 = vmatpush2.msra.mxu0 0.0
        %1324 = vmatprep.subr.mxu0 0.0
        %1325 = vmatpush2.msra.mxu0 0.0
        %1326 = vmatprep.subr.mxu0 0.0
        %1327 = vmatpush2.msra.mxu0 0.0
        %1328 = vmatprep.subr.mxu0 0.0
        %1329 = vmatpush2.msra.mxu0 0.0
        %1330 = vmatprep.subr.mxu0 0.0
        %1331 = vmatpush2.msra.mxu0 0.0
        %1332 = vmatprep.subr.mxu0 0.0
        %1333 = vmatpush2.msra.mxu0 0.0
        %1334 = vmatprep.subr.mxu0 0.0
        %1335 = vmatpush2.msra.mxu0 0.0
        %1336 = vmatprep.subr.mxu0 0.0
        %1337 = vmatpush2.msra.mxu0 0.0
        %1338 = vmatprep.subr.mxu0 0.0
        %1339 = vmatpush2.msra.mxu0 0.0
        %1340 = vmatprep.subr.mxu0 0.0
        %1341 = vmatpush2.msra.mxu0 0.0
        %1342 = vmatprep.subr.mxu0 0.0
        %1343 = vmatpush2.msra.mxu0 0.0
        %1344 = vmatprep.subr.mxu0 0.0
        %1345 = vmatpush2.msra.mxu0 0.0
        %1346 = vmatprep.subr.mxu0 0.0
        %1347 = vmatpush2.msra.mxu0 0.0
        %1348 = vmatprep.subr.mxu0 0.0
        %1349 = vmatpush2.msra.mxu0 0.0
        %1350 = vmatprep.mubr.f32.mxu0 0.0
        %1351 = vmatmul.mubr.f32.gmra.mxu0 %v1284
        %v1352 = vpop.f32.mrf.mxu0
        %v1353 = vadd.f32 0.0, %v1352
        %v1354 = vpop.f32.mrf.mxu0
        %1355 = vdwg.mxu0
        %v1356 = vsel %vm1135, %v551, 0
        %1358 = vmatprep.subr.mxu0 0.0
        %1359 = vmatpush1.msra.mxu0 0.0
        %1360 = vmatprep.subr.mxu0 0.0
        %1361 = vmatpush1.msra.mxu0 0.0
        %1362 = vmatprep.subr.mxu0 0.0
        %1363 = vmatpush1.msra.mxu0 0.0
        %1364 = vmatprep.subr.mxu0 0.0
        %1365 = vmatpush1.msra.mxu0 0.0
        %1366 = vmatprep.subr.mxu0 0.0
        %1367 = vmatpush1.msra.mxu0 0.0
        %1368 = vmatprep.subr.mxu0 0.0
        %1369 = vmatpush1.msra.mxu0 0.0
        %1370 = vmatprep.subr.mxu0 0.0
        %1371 = vmatpush1.msra.mxu0 0.0
        %1372 = vmatprep.subr.mxu0 0.0
        %1373 = vmatpush1.msra.mxu0 0.0
        %1374 = vmatprep.subr.mxu0 0.0
        %1375 = vmatpush1.msra.mxu0 0.0
        %1376 = vmatprep.subr.mxu0 0.0
        %1377 = vmatpush1.msra.mxu0 0.0
        %1378 = vmatprep.subr.mxu0 0.0
        %1379 = vmatpush1.msra.mxu0 0.0
        %1380 = vmatprep.subr.mxu0 0.0
        %1381 = vmatpush1.msra.mxu0 0.0
        %1382 = vmatprep.subr.mxu0 0.0
        %1383 = vmatpush1.msra.mxu0 0.0
        %1384 = vmatprep.subr.mxu0 0.0
        %1385 = vmatpush1.msra.mxu0 0.0
        %1386 = vmatprep.subr.mxu0 0.0
        %1387 = vmatpush1.msra.mxu0 0.0
        %1388 = vmatprep.subr.mxu0 0.0
        %1389 = vmatpush1.msra.mxu0 %v1140
        %1390 = vmatprep.subr.mxu0 0.0
        %1391 = vmatpush2.msra.mxu0 0.0
        %1392 = vmatprep.subr.mxu0 0.0
        %1393 = vmatpush2.msra.mxu0 0.0
        %1394 = vmatprep.subr.mxu0 0.0
        %1395 = vmatpush2.msra.mxu0 0.0
        %1396 = vmatprep.subr.mxu0 0.0
        %1397 = vmatpush2.msra.mxu0 0.0
        %1398 = vmatprep.subr.mxu0 0.0
        %1399 = vmatpush2.msra.mxu0 0.0
        %1400 = vmatprep.subr.mxu0 0.0
        %1401 = vmatpush2.msra.mxu0 0.0
        %1402 = vmatprep.subr.mxu0 0.0
        %1403 = vmatpush2.msra.mxu0 0.0
        %1404 = vmatprep.subr.mxu0 0.0
        %1405 = vmatpush2.msra.mxu0 0.0
        %1406 = vmatprep.subr.mxu0 0.0
        %1407 = vmatpush2.msra.mxu0 0.0
        %1408 = vmatprep.subr.mxu0 0.0
        %1409 = vmatpush2.msra.mxu0 0.0
        %1410 = vmatprep.subr.mxu0 0.0
        %1411 = vmatpush2.msra.mxu0 0.0
        %1412 = vmatprep.subr.mxu0 0.0
        %1413 = vmatpush2.msra.mxu0 0.0
        %1414 = vmatprep.subr.mxu0 0.0
        %1415 = vmatpush2.msra.mxu0 0.0
        %1416 = vmatprep.subr.mxu0 0.0
        %1417 = vmatpush2.msra.mxu0 0.0
        %1418 = vmatprep.subr.mxu0 0.0
        %1419 = vmatpush2.msra.mxu0 0.0
        %1420 = vmatprep.subr.mxu0 0.0
        %1421 = vmatpush2.msra.mxu0 0.0
        %1422 = vmatprep.mubr.f32.mxu0 0.0
        %1423 = vmatmul.mubr.f32.gmra.mxu0 %v1356
        %v1424 = vpop.f32.mrf.mxu0
        %v1425 = vadd.f32 0.0, %v1424
        %v1426 = vpop.f32.mrf.mxu0
        %1427 = vdwg.mxu0
        %1429 = vrot.lane.b32.xlu0 %v1281, 32
        %v1430 = vpop.permute.xlu0 %1429
        %1433 = vrot.lane.b32.xlu0 %v1353, 64
        %v1434 = vpop.permute.xlu0 %1433
        %1437 = vrot.lane.b32.xlu0 %v1425, 96
        %v1438 = vpop.permute.xlu0 %1437
        %v1440 = vsel %vm637, %v1209, %v1430
        %v1441 = vsel %vm639, %v1440, %v1434
        %v1442 = vsel %vm641, %v1441, %v1438
        %v1443 = vlaneseq
        %v1444 = vshrl.u32 %v1443, 7
        %v1445 = vsub.s32 3, %v1444
        %v1446 = vrot.slane %v196, %v1445
        %1447 = vmatprep.subr.mxu0 0.0
        %1448 = vmatpush1.msra.mxu0 %v1134
        %1449 = vmatprep.subr.mxu0 0.0
        %1450 = vmatpush1.msra.mxu0 %v1133
        %1451 = vmatprep.subr.mxu0 0.0
        %1452 = vmatpush1.msra.mxu0 %v1132
        %1453 = vmatprep.subr.mxu0 0.0
        %1454 = vmatpush1.msra.mxu0 %v1131
        %1455 = vmatprep.subr.mxu0 0.0
        %1456 = vmatpush1.msra.mxu0 %v1130
        %1457 = vmatprep.subr.mxu0 0.0
        %1458 = vmatpush1.msra.mxu0 %v1129
        %1459 = vmatprep.subr.mxu0 0.0
        %1460 = vmatpush1.msra.mxu0 %v1128
        %1461 = vmatprep.subr.mxu0 0.0
        %1462 = vmatpush1.msra.mxu0 %v1127
        %1463 = vmatprep.subr.mxu0 0.0
        %1464 = vmatpush1.msra.mxu0 %v1126
        %1465 = vmatprep.subr.mxu0 0.0
        %1466 = vmatpush1.msra.mxu0 %v1125
        %1467 = vmatprep.subr.mxu0 0.0
        %1468 = vmatpush1.msra.mxu0 %v1124
        %1469 = vmatprep.subr.mxu0 0.0
        %1470 = vmatpush1.msra.mxu0 %v1123
        %1471 = vmatprep.subr.mxu0 0.0
        %1472 = vmatpush1.msra.mxu0 %v1122
        %1473 = vmatprep.subr.mxu0 0.0
        %1474 = vmatpush1.msra.mxu0 %v1121
        %1475 = vmatprep.subr.mxu0 0.0
        %1476 = vmatpush1.msra.mxu0 %v1120
        %1477 = vmatprep.subr.mxu0 0.0
        %1478 = vmatpush1.msra.mxu0 %v1119
        %1479 = vmatprep.subr.mxu0 0.0
        %1480 = vmatpush2.msra.mxu0 0.0
        %1481 = vmatprep.subr.mxu0 0.0
        %1482 = vmatpush2.msra.mxu0 0.0
        %1483 = vmatprep.subr.mxu0 0.0
        %1484 = vmatpush2.msra.mxu0 0.0
        %1485 = vmatprep.subr.mxu0 0.0
        %1486 = vmatpush2.msra.mxu0 0.0
        %1487 = vmatprep.subr.mxu0 0.0
        %1488 = vmatpush2.msra.mxu0 0.0
        %1489 = vmatprep.subr.mxu0 0.0
        %1490 = vmatpush2.msra.mxu0 0.0
        %1491 = vmatprep.subr.mxu0 0.0
        %1492 = vmatpush2.msra.mxu0 0.0
        %1493 = vmatprep.subr.mxu0 0.0
        %1494 = vmatpush2.msra.mxu0 0.0
        %1495 = vmatprep.subr.mxu0 0.0
        %1496 = vmatpush2.msra.mxu0 0.0
        %1497 = vmatprep.subr.mxu0 0.0
        %1498 = vmatpush2.msra.mxu0 0.0
        %1499 = vmatprep.subr.mxu0 0.0
        %1500 = vmatpush2.msra.mxu0 0.0
        %1501 = vmatprep.subr.mxu0 0.0
        %1502 = vmatpush2.msra.mxu0 0.0
        %1503 = vmatprep.subr.mxu0 0.0
        %1504 = vmatpush2.msra.mxu0 0.0
        %1505 = vmatprep.subr.mxu0 0.0
        %1506 = vmatpush2.msra.mxu0 0.0
        %1507 = vmatprep.subr.mxu0 0.0
        %1508 = vmatpush2.msra.mxu0 0.0
        %1509 = vmatprep.subr.mxu0 0.0
        %1510 = vmatpush2.msra.mxu0 0.0
        %1511 = vmatprep.mubr.f32.mxu0 0.0
        %1512 = vmatmul.mubr.f32.gmra.mxu0 %v1442
        %v1513 = vpop.f32.mrf.mxu0
        %v1514 = vadd.f32 %v1446, %v1513
        %v1515 = vpop.f32.mrf.mxu0
        %1516 = vdwg.mxu0
        %vm1517 = vcmp.gt.f32.partialorder %v1514, 0.0
        %v1518 = vmul.f32 %v1514, 0.2
        %v1519 = vsel %vm1517, %v1514, %v1518
        %vm1520 = vcmask 254976
        %1521 = vst.msk [vmem:[%s190] sm:$0x3] %vm1520, %v1519
        %s1522 = sand.u32 %s115, 1
        %s1523 = scalar_lea.sflag [#allocation3], %s1522
        %s1524 = sand.u32 %s115, 1
        %s1525 = smul.addr %s1524, 2
        %s1526 = scalar_lea.vmem [#allocation2], %s1525
        // Predicated region
        $region37: #{condition_encoder_apply.1} parent=35 // pred_check
          %p1527 = pneg %p125
        $region38: #{condition_encoder_apply.1} parent=35 // pred_check_branch
          %1529 = sbr.rel (%p1527) target = $region40
        $region39: #{condition_encoder_apply.1} parent=35 // pred_region
          %s1531 = ssub.s32 32, 32
          %1532 = vsyncadd %s1523, %s1531
          %s1533 = smul.addr %s18, 32
          %s1534 = scalar_lea.hbm %s4, %s1533
          %s1536 = sshll.u32 %s1526, 4
          %s1537 = int_to_ptr.vmem [resolvable:$true] %s1536
          %1539 = dma.vmem_to_hbm [thread:$0]  %s1537, 32, %s1534, %s1523
        $region40: #{condition_encoder_apply.1} parent=35 // pred_fallthru
          _
      $region36: #{condition_encoder_apply.1} parent=5 // pred_fallthru
        _
      %p1540 = scmp.le.s32.totalorder 2, %s13
      // Predicated region
      $region41: #{condition_encoder_apply.1} parent=5 // pred_check
        %p1541 = pneg %p1540
      $region42: #{condition_encoder_apply.1} parent=5 // pred_check_branch
        %1543 = sbr.rel (%p1541) target = $region44
      $region43: #{condition_encoder_apply.1} parent=5 // pred_region
        %s1544 = ssub.s32 %s13, 2
        // Predicated region
        $region45: #{condition_encoder_apply.1} parent=43 // pred_check
          %p1545 = pneg %p131
        $region46: #{condition_encoder_apply.1} parent=43 // pred_check_branch
          %1547 = sbr.rel (%p1545) target = $region48
        $region47: #{condition_encoder_apply.1} parent=43 // pred_region
          %s1548 = sand.u32 %s116, 1
          %s1549 = scalar_lea.sflag [#allocation3], %s1548
          %s1550 = sand.u32 %s116, 1
          %s1551 = smul.addr %s1550, 2
          %s1552 = scalar_lea.vmem [#allocation2], %s1551
          %1553 = dma.done %s1549, 32
        $region48: #{condition_encoder_apply.1} parent=43 // pred_fallthru
          _
      $region44: #{condition_encoder_apply.1} parent=5 // pred_fallthru
        _
    $region6: #{condition_encoder_apply.1} parent=1 // loop_footer
      %s17 = sadd.s32 1, %s13
    $region7: #{condition_encoder_apply.1} parent=1 // loop_footer_branch
      %12 = sbr.rel target = $region3
    $region8: #{condition_encoder_apply.1} parent=1 // loop_exit
      _
    %1554 = vsyncpa [#allocation3], 1
    %s1555 = scalar_lea.sflag [#allocation3], 1
    %1556 = vsyncpa %s1555, 1

</llo_original>
